<compile_context>
chip_gen: v6e
topology: v6e:2x2x1
jax: 0.10.0
libtpu: 0.0.40
codegen_flags: <defaults>
</compile_context>

<pallas_src>
import numpy as np
import jax
import jax.numpy as jnp
from jax import lax
from jax.experimental import pallas as pl
from jax.experimental.pallas import tpu as pltpu

# ---- model sizes (small, consistent with the module's forward) --------------
E = 32                     # emb_dim
H = 2 * E                  # per-encoder GRU hidden (64)
H2 = 2 * H                 # both encoders' hidden, == 4E (128)
H6 = 6 * H                 # fused gate width [r0|r1|z0|z1|n0|n1] (384)
V0, V1, V2 = 16, 16, 128   # vocab sizes: diagnoses, procedures, medications
F32 = jnp.float32

_VMEM = pl.BlockSpec(memory_space=pltpu.MemorySpace.VMEM)
_SMEM = pl.BlockSpec(memory_space=pltpu.MemorySpace.SMEM)


def _mm(a, b):
    return jnp.dot(a, b, preferred_element_type=jnp.float32)


# ================= one-shot drug_memory kernel (parameter-only) ==============
def drug_memory_kernel(mp_ref, adj_e_ref, adj_d_ref,
                       we1_ref, be1_ref, we2_ref, be2_ref,
                       wd1_ref, bd1_ref, wd2_ref, bd2_ref,
                       inter_ref, dm_ref):
    """drug_memory = ehr_gcn(MPNN_emb) - inter * ddi_gcn(MPNN_emb).
    TODO(synk): the `GAT` class used by GraphAT is not defined in the source
    file; GraphConvolution semantics (adj_norm @ (x @ W) + b) are used, and
    Dropout(p=0.3) is identity (eval mode)."""
    x = mp_ref[...]                                    # (V2, E)

    def gcn(adj, w1, b1, w2, b2):
        h = jnp.maximum(_mm(adj, _mm(x, w1)) + b1, 0.0)
        return _mm(adj, _mm(h, w2)) + b2

    dm_e = gcn(adj_e_ref[...], we1_ref[...], be1_ref[...], we2_ref[...], be2_ref[...])
    dm_d = gcn(adj_d_ref[...], wd1_ref[...], bd1_ref[...], wd2_ref[...], bd2_ref[...])
    dm_ref[...] = dm_e - inter_ref[0, 0] * dm_d


def precompute_drug_memory(params):
    """Run once per weight state; returns params + derived VMEM-friendly tensors."""
    args = (params['mpnn_emb'], params['ehr_adj_norm'], params['ddi_adj_norm'],
            params['ehr_w1'], params['ehr_b1'], params['ehr_w2'], params['ehr_b2'],
            params['ddi_w1'], params['ddi_b1'], params['ddi_w2'], params['ddi_b2'],
            params['inter'])
    in_specs = [_VMEM] * 11 + [_SMEM]                  # `inter` scalar in SMEM
    dm = pl.pallas_call(
        drug_memory_kernel,
        out_shape=jax.ShapeDtypeStruct((V2, E), F32),
        in_specs=in_specs,
        out_specs=_VMEM,
    )(*args)
    out = dict(params)
    out['dm'] = dm
    # fused key matrix: sigmoid(q @ [dm ; MPNN_emb]^T) gives key_w | MPNN_match
    out['keys_t'] = jnp.transpose(jnp.concatenate([dm, params['mpnn_emb']], axis=0))
    return out


# ===================== per-admission fused readout kernel ====================
def dnmdr_step_kernel(x_ref, wih_ref, whh_ref, bih_ref, bhh_ref,
                      wq_ref, bq_ref, keys_ref, dm_ref,
                      wm_ref, bm_ref, lng_ref, lnb_ref,
                      wo_ref, bo_ref, res_ref):
    """GRU encoders + query + attention readout, fully VMEM-resident."""
    # ---- fused dual-GRU: both encoders in 2 matmuls per step -----------------
    wih, whh = wih_ref[...], whh_ref[...]              # (2E, 6H), (2H, 6H)
    bih, bhh = bih_ref[...], bhh_ref[...]              # (1, 6H)
    h = jnp.zeros((1, H2), F32)                        # [h_diag (0:H) | h_proc (H:2H)]
    for t in range(x_ref.shape[0]):                    # static T (== 1): unrolled
        x_t = x_ref[pl.ds(t, 1), :]                    # (1, 2E) = [i1_t | i2_t]
        gi = _mm(x_t, wih) + bih                       # (1, 6H)
        gh = _mm(h, whh) + bhh                         # (1, 6H)
        r = jax.nn.sigmoid(gi[:, :H2] + gh[:, :H2])
        z = jax.nn.sigmoid(gi[:, H2:2 * H2] + gh[:, H2:2 * H2])
        n = jnp.tanh(gi[:, 2 * H2:] + r * gh[:, 2 * H2:])
        h = (1.0 - z) * n + z * h

    # h == cat([o1[-1], o2[-1]], -1): the patient representation (1, 4E)
    # ---- query head: Sequential(ReLU, Linear(4E, E)) -------------------------
    q = _mm(jnp.maximum(h, 0.0), wq_ref[...]) + bq_ref[...]           # (1, E)

    # ---- fused key_weights / MPNN_match: one (1,E)x(E,2V2) matmul ------------
    km = jax.nn.sigmoid(_mm(q, keys_ref[...]))         # (1, 2*V2)
    key_w = km[:, :V2]                                 # sigmoid(q @ dm.T)
    mpnn_match = km[:, V2:]                            # sigmoid(q @ MPNN_emb.T)

    fact1 = _mm(key_w, dm_ref[...])                    # (1, E)

    # ---- MPNN_output Linear(V2, V2) + LayerNorm(V2) --------------------------
    pre = mpnn_match + _mm(mpnn_match, wm_ref[...]) + bm_ref[...]
    mu = jnp.mean(pre, axis=-1, keepdims=True)
    var = jnp.mean(jnp.square(pre - mu), axis=-1, keepdims=True)
    mpnn_att = (pre - mu) * lax.rsqrt(var + 1e-5) * lng_ref[...] + lnb_ref[...]

    # ---- output head: Sequential(ReLU, Linear(2E, V2)) on [q | fact1] --------
    qf = jnp.concatenate([jnp.maximum(q, 0.0), jnp.maximum(fact1, 0.0)], axis=-1)
    res_ref[...] = (_mm(qf, wo_ref[...]) + bo_ref[...]) * mpnn_att


def _step_forward(x_cat, p):
    args = (x_cat,
            p['gru_wih_bd'], p['gru_whh_bd'], p['gru_bih_cat'], p['gru_bhh_cat'],
            p['wq_t'], p['bq'], p['keys_t'], p['dm'],
            p['wm_t'], p['bm'], p['ln_g'], p['ln_b'],
            p['wo_t'], p['bo'])

    T = int(x_cat.shape[0])
    flops = (2 * T * (2 * E * H6 + H2 * H6)                              # fused GRU
             + 2 * (4 * E * E + E * 2 * V2 + V2 * E + V2 * V2 + 2 * E * V2))  # readout
    transcendentals = T * 3 * H2 + 2 * V2
    bytes_accessed = sum(int(np.prod(a.shape)) * 4 for a in args) + V2 * 4

    return pl.pallas_call(
        dnmdr_step_kernel,
        out_shape=jax.ShapeDtypeStruct((1, V2), F32),
        in_specs=[_VMEM] * len(args),
        out_specs=_VMEM,
        cost_estimate=pl.CostEstimate(flops=flops,
                                      transcendentals=transcendentals,
                                      bytes_accessed=bytes_accessed),
    )(*args)


# =========================== parameter setup =================================
def _row_normalize(mx):
    mx = mx + np.eye(mx.shape[0], dtype=np.float32)
    rowsum = mx.sum(1)
    r_inv = np.where(rowsum > 0, 1.0 / rowsum, 0.0).astype(np.float32)
    return (r_inv[:, None] * mx).astype(np.float32)


def init_params(key):
    ks = list(jax.random.split(key, 48))
    it = iter(ks)

    def u(shape, scale=0.1):
        return jax.random.uniform(next(it), shape, F32, -scale, scale)

    p = {}
    # embeddings (init_weights: uniform(-0.1, 0.1))
    p['emb0'] = u((V0, E))
    p['emb1'] = u((V1, E))
    p['emb2'] = u((V2, E))          # unused in the single-visit branch

    # GRU encoders (emb_dim -> 2*emb_dim), PyTorch layout: gate rows [r|z|n]
    def gru_params(in_dim, hid):
        s = 1.0 / np.sqrt(hid)
        return (u((3 * hid, in_dim), s), u((3 * hid, hid), s),
                u((1, 3 * hid), s), u((1, 3 * hid), s))

    g = [gru_params(E, H), gru_params(E, H)]
    p['gru_wih'] = jnp.stack([g[0][0], g[1][0]])       # (2, 3H, E)   (reference)
    p['gru_whh'] = jnp.stack([g[0][1], g[1][1]])       # (2, 3H, H)
    p['gru_bih'] = jnp.stack([g[0][2], g[1][2]])       # (2, 1, 3H)
    p['gru_bhh'] = jnp.stack([g[0][3], g[1][3]])       # (2, 1, 3H)

    # host-side block-diagonal stacking of BOTH encoders' gates (pre-transposed):
    # column layout [r0|r1|z0|z1|n0|n1]; rows of wih_bd: [x1-input | x2-input].
    wih_bd = np.zeros((2 * E, H6), np.float32)
    whh_bd = np.zeros((H2, H6), np.float32)
    bih_c = np.zeros((1, H6), np.float32)
    bhh_c = np.zeros((1, H6), np.float32)
    for enc in range(2):
        wih_t = np.asarray(g[enc][0]).T                # (E, 3H)
        whh_t = np.asarray(g[enc][1]).T                # (H, 3H)
        bih = np.asarray(g[enc][2])[0]
        bhh = np.asarray(g[enc][3])[0]
        for gate in range(3):                          # r, z, n
            c0 = (2 * gate + enc) * H
            wih_bd[enc * E:(enc + 1) * E, c0:c0 + H] = wih_t[:, gate * H:(gate + 1) * H]
            whh_bd[enc * H:(enc + 1) * H, c0:c0 + H] = whh_t[:, gate * H:(gate + 1) * H]
            bih_c[0, c0:c0 + H] = bih[gate * H:(gate + 1) * H]
            bhh_c[0, c0:c0 + H] = bhh[gate * H:(gate + 1) * H]
    p['gru_wih_bd'] = jnp.asarray(wih_bd)              # (2E, 6H)
    p['gru_whh_bd'] = jnp.asarray(whh_bd)              # (2H, 6H)
    p['gru_bih_cat'] = jnp.asarray(bih_c)              # (1, 6H)
    p['gru_bhh_cat'] = jnp.asarray(bhh_c)              # (1, 6H)

    # query: Sequential(ReLU, Linear(4E, E))   (pre-transposed for the kernel)
    p['wq'] = u((E, 4 * E)); p['bq'] = u((1, E))
    p['wq_t'] = jnp.transpose(p['wq'])                 # (4E, E)

    # GraphAT weights (two layers each for ehr / ddi graphs)
    for name in ('ehr', 'ddi'):
        p[f'{name}_w1'] = u((E, E)); p[f'{name}_b1'] = u((1, E))
        p[f'{name}_w2'] = u((E, E)); p[f'{name}_b2'] = u((1, E))
    p['inter'] = jnp.full((1, 1), 0.5, F32)  # nn.Parameter(FloatTensor(1)) — synthetic

    # MPNN_output Linear(V2, V2) + LayerNorm(V2)
    p['wm'] = u((V2, V2), 1.0 / np.sqrt(V2)); p['bm'] = u((1, V2))
    p['wm_t'] = jnp.transpose(p['wm'])                 # (V2, V2)
    p['ln_g'] = jnp.ones((1, V2), F32); p['ln_b'] = jnp.zeros((1, V2), F32)

    # output: Sequential(ReLU, Linear(2E, V2))
    p['wo'] = u((V2, 2 * E)); p['bo'] = u((1, V2))
    p['wo_t'] = jnp.transpose(p['wo'])                 # (2E, V2)

    # adjacency matrices (ehr / ddi), row-normalized with self loops
    rng = np.random.RandomState(0)

    def rand_adj(n, density=0.1):
        a = (rng.rand(n, n) < density).astype(np.float32)
        a = np.maximum(a, a.T)
        np.fill_diagonal(a, 0.0)
        return a

    ehr_adj = rand_adj(V2)
    ddi_adj = rand_adj(V2)
    p['ehr_adj_norm'] = jnp.asarray(_row_normalize(ehr_adj))
    p['ddi_adj_norm'] = jnp.asarray(_row_normalize(ddi_adj))
    p['ddi_adj'] = jnp.asarray(ddi_adj)

    # ---- MPNN_emb precompute (done in __init__ in the reference; plain JAX) --
    n_fingerprints = 20
    mol_sizes = [3, 4, 5, 3, 4, 5, 3, 5]
    n_atoms, n_mols = sum(mol_sizes), len(mol_sizes)
    fps = rng.randint(0, n_fingerprints, size=(n_atoms,))
    adjacency = np.zeros((n_atoms, n_atoms), np.float32)
    off = 0
    for s in mol_sizes:                                # block-diagonal "pad"
        b = (rng.rand(s, s) < 0.5).astype(np.float32)
        b = np.maximum(b, b.T); np.fill_diagonal(b, 0.0)
        adjacency[off:off + s, off:off + s] = b
        off += s
    embed_fp = u((n_fingerprints, E))
    v = embed_fp[jnp.asarray(fps)]
    adj_j = jnp.asarray(adjacency)
    for _ in range(2):                                 # layer_hidden = 2
        Wl, bl = u((E, E)), u((1, E))
        hs = jax.nn.relu(v @ Wl.T + bl)
        v = hs + adj_j @ hs
    seg = jnp.asarray(np.repeat(np.arange(n_mols), mol_sizes))
    mol_vecs = jax.ops.segment_sum(v, seg, num_segments=n_mols)
    avg_proj = rng.rand(V2, n_mols).astype(np.float32)
    avg_proj = avg_proj / avg_proj.sum(1, keepdims=True)
    p['mpnn_emb'] = jnp.asarray(avg_proj) @ mol_vecs   # (V2, E)
    return p


# ============================== forward ======================================
def dnmdr_forward(params, adm):
    """Single-visit branch of DNMDR.forward (len(input) == 1).
    adm = (diagnosis code list, procedure code list).  `params` must have been
    passed through precompute_drug_memory (once per weight state)."""
    # TODO(synk): the multi-visit branch needs external `egcn_o.EGCN` and
    # `u.sparse_prepare_tensor`, which are not defined anywhere in the source
    # file, so it cannot be translated faithfully.
    diag_codes, proc_codes = adm
    # sum_embedding(dropout(embedding(codes))) — dropout identity (eval mode)
    i1 = params['emb0'][jnp.asarray(diag_codes)].sum(axis=0, keepdims=True)  # (1, E)
    i2 = params['emb1'][jnp.asarray(proc_codes)].sum(axis=0, keepdims=True)  # (1, E)
    x_cat = jnp.concatenate([i1, i2], axis=-1)         # (T=1, 2E) fused GRU input

    result = _step_forward(x_cat, params)              # (1, V2)

    # DDI regularizer as a trailing XLA op (per perf review: keeps the 64 KiB
    # ddi DMA + matmul + reduce out of the latency-bound kernel tail).
    npp = jax.nn.sigmoid(result)
    batch_neg = 0.0005 * jnp.sum(jnp.dot(npp, params['ddi_adj']) * npp)
    return result, batch_neg


# ====================== pure-JAX reference (for checking) ====================
def dnmdr_reference(params, adm):
    P = lax.Precision.HIGHEST
    mm = lambda a, b: jnp.dot(a, b, precision=P)
    diag_codes, proc_codes = adm
    i1 = params['emb0'][jnp.asarray(diag_codes)].sum(axis=0, keepdims=True)
    i2 = params['emb1'][jnp.asarray(proc_codes)].sum(axis=0, keepdims=True)

    def gru_last(x_seq, g):
        wih, whh = params['gru_wih'][g], params['gru_whh'][g]
        bih, bhh = params['gru_bih'][g], params['gru_bhh'][g]
        h = jnp.zeros((1, H), F32)
        for t in range(x_seq.shape[0]):
            x_t = x_seq[t:t + 1]
            gi = mm(x_t, wih.T) + bih
            gh = mm(h, whh.T) + bhh
            r = jax.nn.sigmoid(gi[:, :H] + gh[:, :H])
            z = jax.nn.sigmoid(gi[:, H:2 * H] + gh[:, H:2 * H])
            n = jnp.tanh(gi[:, 2 * H:] + r * gh[:, 2 * H:])
            h = (1.0 - z) * n + z * h
        return h

    pr = jnp.concatenate([gru_last(i1, 0), gru_last(i2, 1)], axis=-1)
    q = mm(jnp.maximum(pr, 0.0), params['wq'].T) + params['bq']

    def gcn(x, adj, w1, b1, w2, b2):
        h = jnp.maximum(mm(adj, mm(x, w1)) + b1, 0.0)
        return mm(adj, mm(h, w2)) + b2

    mp = params['mpnn_emb']
    dm = (gcn(mp, params['ehr_adj_norm'], params['ehr_w1'], params['ehr_b1'],
              params['ehr_w2'], params['ehr_b2'])
          - gcn(mp, params['ddi_adj_norm'], params['ddi_w1'], params['ddi_b1'],
                params['ddi_w2'], params['ddi_b2']) * params['inter'][0, 0])

    key_w = jax.nn.sigmoid(mm(q, dm.T))
    fact1 = mm(key_w, dm)
    mpnn_match = jax.nn.sigmoid(mm(q, mp.T))
    pre = mpnn_match + mm(mpnn_match, params['wm'].T) + params['bm']
    mu = jnp.mean(pre, axis=-1, keepdims=True)
    var = jnp.mean(jnp.square(pre - mu), axis=-1, keepdims=True)
    mpnn_att = (pre - mu) * lax.rsqrt(var + 1e-5) * params['ln_g'] + params['ln_b']
    qf = jnp.maximum(jnp.concatenate([q, fact1], axis=-1), 0.0)
    result = (mm(qf, params['wo'].T) + params['bo']) * mpnn_att
    npp = jax.nn.sigmoid(result)
    batch_neg = 0.0005 * jnp.sum(mm(npp, params['ddi_adj']) * npp)
    return result, batch_neg


if __name__ == "__main__":
    key = jax.random.PRNGKey(0)
    params = init_params(key)
    params = precompute_drug_memory(params)    # one-shot Pallas GCN precompute

    # one admission: (diagnosis codes, procedure codes)
    adm = ([1, 3, 5, 7], [0, 2, 4])

    result, batch_neg = dnmdr_forward(params, adm)
    (result, batch_neg) = jax.block_until_ready((result, batch_neg))

    assert result.shape == (1, V2) and result.dtype == jnp.float32
    assert np.isfinite(np.asarray(result)).all()
    assert np.isfinite(float(batch_neg))

    ref_result, ref_neg = dnmdr_reference(params, adm)
    np.testing.assert_allclose(np.asarray(result), np.asarray(ref_result),
                               rtol=2e-2, atol=2e-3)
    np.testing.assert_allclose(float(batch_neg), float(ref_neg),
                               rtol=2e-2, atol=2e-3)

    print("KERNEL_OK")
</pallas_src>

<mosaic_0001>
module attributes {stable_mosaic.version = 11 : i64} {
  func.func @drug_memory_kernel(%arg0: memref<128x32xf32, #tpu.memory_space<vmem>>, %arg1: memref<128x128xf32, #tpu.memory_space<vmem>>, %arg2: memref<128x128xf32, #tpu.memory_space<vmem>>, %arg3: memref<32x32xf32, #tpu.memory_space<vmem>>, %arg4: memref<1x32xf32, #tpu.memory_space<vmem>>, %arg5: memref<32x32xf32, #tpu.memory_space<vmem>>, %arg6: memref<1x32xf32, #tpu.memory_space<vmem>>, %arg7: memref<32x32xf32, #tpu.memory_space<vmem>>, %arg8: memref<1x32xf32, #tpu.memory_space<vmem>>, %arg9: memref<32x32xf32, #tpu.memory_space<vmem>>, %arg10: memref<1x32xf32, #tpu.memory_space<vmem>>, %arg11: memref<1x1xf32, #tpu.memory_space<smem>>, %arg12: memref<128x32xf32, #tpu.memory_space<vmem>>) attributes {dimension_semantics = [], scalar_prefetch = 0 : i64, scratch_operands = 0 : i64, tpu.core_type = #tpu.core_type<tc>} {
    %c0 = arith.constant 0 : index
    %c0_0 = arith.constant 0 : index
    %0 = vector.load %arg0[%c0, %c0_0] : memref<128x32xf32, #tpu.memory_space<vmem>>, vector<128x32xf32>
    %c0_1 = arith.constant 0 : index
    %c0_2 = arith.constant 0 : index
    %1 = vector.load %arg1[%c0_1, %c0_2] : memref<128x128xf32, #tpu.memory_space<vmem>>, vector<128x128xf32>
    %c0_3 = arith.constant 0 : index
    %c0_4 = arith.constant 0 : index
    %2 = vector.load %arg3[%c0_3, %c0_4] : memref<32x32xf32, #tpu.memory_space<vmem>>, vector<32x32xf32>
    %c0_5 = arith.constant 0 : index
    %c0_6 = arith.constant 0 : index
    %3 = vector.load %arg4[%c0_5, %c0_6] : memref<1x32xf32, #tpu.memory_space<vmem>>, vector<1x32xf32>
    %c0_7 = arith.constant 0 : index
    %c0_8 = arith.constant 0 : index
    %4 = vector.load %arg5[%c0_7, %c0_8] : memref<32x32xf32, #tpu.memory_space<vmem>>, vector<32x32xf32>
    %c0_9 = arith.constant 0 : index
    %c0_10 = arith.constant 0 : index
    %5 = vector.load %arg6[%c0_9, %c0_10] : memref<1x32xf32, #tpu.memory_space<vmem>>, vector<1x32xf32>
    %cst = arith.constant dense<0.000000e+00> : vector<128x32xf32>
    %6 = tpu.matmul %0, %2, %cst {dimension_numbers = #tpu.dot_dimension_numbers<[1], [0], [0], [1], [0, 0, 1, 1], [], []>} : vector<128x32xf32>, vector<32x32xf32>, vector<128x32xf32> -> vector<128x32xf32>
    %cst_11 = arith.constant dense<0.000000e+00> : vector<128x32xf32>
    %7 = tpu.matmul %1, %6, %cst_11 {dimension_numbers = #tpu.dot_dimension_numbers<[1], [0], [0], [1], [0, 0, 1, 1], [], []>} : vector<128x128xf32>, vector<128x32xf32>, vector<128x32xf32> -> vector<128x32xf32>
    %8 = vector.broadcast %3 : vector<1x32xf32> to vector<128x32xf32>
    %9 = arith.addf %7, %8 : vector<128x32xf32>
    %cst_12 = arith.constant 0.000000e+00 : f32
    %10 = vector.broadcast %cst_12 : f32 to vector<128x32xf32>
    %11 = arith.maximumf %9, %10 : vector<128x32xf32>
    %cst_13 = arith.constant dense<0.000000e+00> : vector<128x32xf32>
    %12 = tpu.matmul %11, %4, %cst_13 {dimension_numbers = #tpu.dot_dimension_numbers<[1], [0], [0], [1], [0, 0, 1, 1], [], []>} : vector<128x32xf32>, vector<32x32xf32>, vector<128x32xf32> -> vector<128x32xf32>
    %cst_14 = arith.constant dense<0.000000e+00> : vector<128x32xf32>
    %13 = tpu.matmul %1, %12, %cst_14 {dimension_numbers = #tpu.dot_dimension_numbers<[1], [0], [0], [1], [0, 0, 1, 1], [], []>} : vector<128x128xf32>, vector<128x32xf32>, vector<128x32xf32> -> vector<128x32xf32>
    %14 = vector.broadcast %5 : vector<1x32xf32> to vector<128x32xf32>
    %15 = arith.addf %13, %14 : vector<128x32xf32>
    %c0_15 = arith.constant 0 : index
    %c0_16 = arith.constant 0 : index
    %16 = vector.load %arg2[%c0_15, %c0_16] : memref<128x128xf32, #tpu.memory_space<vmem>>, vector<128x128xf32>
    %c0_17 = arith.constant 0 : index
    %c0_18 = arith.constant 0 : index
    %17 = vector.load %arg7[%c0_17, %c0_18] : memref<32x32xf32, #tpu.memory_space<vmem>>, vector<32x32xf32>
    %c0_19 = arith.constant 0 : index
    %c0_20 = arith.constant 0 : index
    %18 = vector.load %arg8[%c0_19, %c0_20] : memref<1x32xf32, #tpu.memory_space<vmem>>, vector<1x32xf32>
    %c0_21 = arith.constant 0 : index
    %c0_22 = arith.constant 0 : index
    %19 = vector.load %arg9[%c0_21, %c0_22] : memref<32x32xf32, #tpu.memory_space<vmem>>, vector<32x32xf32>
    %c0_23 = arith.constant 0 : index
    %c0_24 = arith.constant 0 : index
    %20 = vector.load %arg10[%c0_23, %c0_24] : memref<1x32xf32, #tpu.memory_space<vmem>>, vector<1x32xf32>
    %cst_25 = arith.constant dense<0.000000e+00> : vector<128x32xf32>
    %21 = tpu.matmul %0, %17, %cst_25 {dimension_numbers = #tpu.dot_dimension_numbers<[1], [0], [0], [1], [0, 0, 1, 1], [], []>} : vector<128x32xf32>, vector<32x32xf32>, vector<128x32xf32> -> vector<128x32xf32>
    %cst_26 = arith.constant dense<0.000000e+00> : vector<128x32xf32>
    %22 = tpu.matmul %16, %21, %cst_26 {dimension_numbers = #tpu.dot_dimension_numbers<[1], [0], [0], [1], [0, 0, 1, 1], [], []>} : vector<128x128xf32>, vector<128x32xf32>, vector<128x32xf32> -> vector<128x32xf32>
    %23 = vector.broadcast %18 : vector<1x32xf32> to vector<128x32xf32>
    %24 = arith.addf %22, %23 : vector<128x32xf32>
    %cst_27 = arith.constant 0.000000e+00 : f32
    %25 = vector.broadcast %cst_27 : f32 to vector<128x32xf32>
    %26 = arith.maximumf %24, %25 : vector<128x32xf32>
    %cst_28 = arith.constant dense<0.000000e+00> : vector<128x32xf32>
    %27 = tpu.matmul %26, %19, %cst_28 {dimension_numbers = #tpu.dot_dimension_numbers<[1], [0], [0], [1], [0, 0, 1, 1], [], []>} : vector<128x32xf32>, vector<32x32xf32>, vector<128x32xf32> -> vector<128x32xf32>
    %cst_29 = arith.constant dense<0.000000e+00> : vector<128x32xf32>
    %28 = tpu.matmul %16, %27, %cst_29 {dimension_numbers = #tpu.dot_dimension_numbers<[1], [0], [0], [1], [0, 0, 1, 1], [], []>} : vector<128x128xf32>, vector<128x32xf32>, vector<128x32xf32> -> vector<128x32xf32>
    %29 = vector.broadcast %20 : vector<1x32xf32> to vector<128x32xf32>
    %30 = arith.addf %28, %29 : vector<128x32xf32>
    %c0_30 = arith.constant 0 : index
    %c0_31 = arith.constant 0 : index
    %31 = memref.load %arg11[%c0_30, %c0_31] : memref<1x1xf32, #tpu.memory_space<smem>>
    %32 = vector.broadcast %31 : f32 to vector<128x32xf32>
    %33 = arith.mulf %32, %30 : vector<128x32xf32>
    %34 = arith.subf %15, %33 : vector<128x32xf32>
    %c0_32 = arith.constant 0 : index
    %c0_33 = arith.constant 0 : index
    %35 = vector.load %arg12[%c0_32, %c0_33] : memref<128x32xf32, #tpu.memory_space<vmem>>, vector<128x32xf32>
    tpu.vector_store %arg12[%c0_32, %c0_33], %34 {strides = array<i32>} : memref<128x32xf32, #tpu.memory_space<vmem>>, vector<128x32xf32>,
    return
  }
}

</mosaic_0001>

<llo_original>
// kernel: tpu_custom_call.1
$region0: #{tpu_custom_call.1}
  #allocation0 [shape = 'u32[]', space=smem, size = 0x4, offset = 0x4, fixed_abs, tag = 'smem constant byte address 0x4 - core index']
  #allocation1 [shape = 'u32[144,128]{1,0:T(1,128)}', space=vmem, size = 0x12000, scoped, tag = 'internal scratch']
  #allocation2 [shape = 'f32[1,1]{1,0:T(1,128)S(6)}', space=smem, size = 0x200, scoped, tag = 'scoped memory for tpu_custom_call.1']
  %s0 = inlined_call_operand.vmem [shape: f32[128,32], index: 0, kind: input, shape index: {}]
  %s1 = inlined_call_operand.vmem [shape: f32[128,128], index: 1, kind: input, shape index: {}]
  %s2 = inlined_call_operand.hbm [shape: f32[128,128], index: 2, kind: input, shape index: {}]
  %s3 = inlined_call_operand.vmem [shape: f32[32,32], index: 3, kind: input, shape index: {}]
  %s4 = inlined_call_operand.vmem [shape: f32[1,32], index: 4, kind: input, shape index: {}]
  %s5 = inlined_call_operand.hbm [shape: f32[32,32], index: 5, kind: input, shape index: {}]
  %s6 = inlined_call_operand.vmem [shape: f32[1,32], index: 6, kind: input, shape index: {}]
  %s7 = inlined_call_operand.hbm [shape: f32[32,32], index: 7, kind: input, shape index: {}]
  %s8 = inlined_call_operand.vmem [shape: f32[1,32], index: 8, kind: input, shape index: {}]
  %s9 = inlined_call_operand.hbm [shape: f32[32,32], index: 9, kind: input, shape index: {}]
  %s10 = inlined_call_operand.vmem [shape: f32[1,32], index: 10, kind: input, shape index: {}]
  %s11 = inlined_call_operand.<no memory space> [shape: f32[1,1], index: 11, kind: input, shape index: {}]
  %s12 = inlined_call_operand.vmem [shape: f32[128,32], index: 12, kind: output, shape index: {}]
  %s13 = sld [smem:[#allocation0]]
  $region74: #{tpu_custom_call.1} parent=0
    _
  %s15 = ssub.s32 1, %s13
  %s16 = scalar_select 0, %s15, %s13
  %17 = sst [smem:[#allocation2]] %s11
  $region1: #{tpu_custom_call.1} parent=0
    #allocation3 [shape = 'u8[65536]{0}', space=vmem, size = 0x10000, scoped, tag = 'input window, operand 2, single buffered']
    #allocation4 [shape = 's32[1]{0}', space=sflag, size = 0x4, scoped, tag = 'scoped memory for tpu_custom_call.1']
    #allocation5 [shape = 'u8[16384]{0}', space=vmem, size = 0x4000, scoped, tag = 'input window, operand 5, single buffered']
    #allocation6 [shape = 's32[1]{0}', space=sflag, size = 0x4, scoped, tag = 'scoped memory for tpu_custom_call.1']
    #allocation7 [shape = 'u8[16384]{0}', space=vmem, size = 0x4000, scoped, tag = 'input window, operand 7, single buffered']
    #allocation8 [shape = 'u8[16384]{0}', space=vmem, size = 0x4000, scoped, tag = 'input window, operand 9, single buffered']
    #allocation9 [shape = 's32[1]{0}', space=sflag, size = 0x4, scoped, tag = 'scoped memory for tpu_custom_call.1']
    %18 = vsyncpa [#allocation4], 0
    %19 = vsyncpa [#allocation6], 0
    %20 = vsyncpa [#allocation9], 0
    // Predicated region
    $region2: #{tpu_custom_call.1} parent=1 // pred_check
      _
    $region3: #{tpu_custom_call.1} parent=1 // pred_check_branch
      %22 = sbr.rel (0) target = $region5
    $region4: #{tpu_custom_call.1} parent=1 // pred_region
      _
    $region5: #{tpu_custom_call.1} parent=1 // pred_fallthru
      _
    // Predicated region
    $region6: #{tpu_custom_call.1} parent=1 // pred_check
      _
    $region7: #{tpu_custom_call.1} parent=1 // pred_check_branch
      %24 = sbr.rel (0) target = $region9
    $region8: #{tpu_custom_call.1} parent=1 // pred_region
      _
    $region9: #{tpu_custom_call.1} parent=1 // pred_fallthru
      _
    // Predicated region
    $region10: #{tpu_custom_call.1} parent=1 // pred_check
      _
    $region11: #{tpu_custom_call.1} parent=1 // pred_check_branch
      %26 = sbr.rel (0) target = $region13
    $region12: #{tpu_custom_call.1} parent=1 // pred_region
      %s28 = ssub.s32 2048, 2048
      %29 = vsyncadd [#allocation4], %s28
      %s30 = sshll.u32 [#allocation3], 4
      %s31 = int_to_ptr.vmem [resolvable:$true] %s30
      %36 = dma.hbm_to_vmem [thread:$0]  %s2, 2048, %s31, [#allocation4], 128, 128, 8
    $region13: #{tpu_custom_call.1} parent=1 // pred_fallthru
      _
    // Predicated region
    $region14: #{tpu_custom_call.1} parent=1 // pred_check
      _
    $region15: #{tpu_custom_call.1} parent=1 // pred_check_branch
      %38 = sbr.rel (0) target = $region17
    $region16: #{tpu_custom_call.1} parent=1 // pred_region
      _
    $region17: #{tpu_custom_call.1} parent=1 // pred_fallthru
      _
    // Predicated region
    $region18: #{tpu_custom_call.1} parent=1 // pred_check
      _
    $region19: #{tpu_custom_call.1} parent=1 // pred_check_branch
      %40 = sbr.rel (0) target = $region21
    $region20: #{tpu_custom_call.1} parent=1 // pred_region
      _
    $region21: #{tpu_custom_call.1} parent=1 // pred_fallthru
      _
    // Predicated region
    $region22: #{tpu_custom_call.1} parent=1 // pred_check
      _
    $region23: #{tpu_custom_call.1} parent=1 // pred_check_branch
      %42 = sbr.rel (0) target = $region25
    $region24: #{tpu_custom_call.1} parent=1 // pred_region
      %s44 = ssub.s32 512, 512
      %45 = vsyncadd [#allocation6], %s44
      %s46 = sshll.u32 [#allocation5], 4
      %s47 = int_to_ptr.vmem [resolvable:$true] %s46
      %52 = dma.hbm_to_vmem [thread:$0]  %s5, 512, %s47, [#allocation6], 128, 128, 8
    $region25: #{tpu_custom_call.1} parent=1 // pred_fallthru
      _
    // Predicated region
    $region26: #{tpu_custom_call.1} parent=1 // pred_check
      _
    $region27: #{tpu_custom_call.1} parent=1 // pred_check_branch
      %54 = sbr.rel (0) target = $region29
    $region28: #{tpu_custom_call.1} parent=1 // pred_region
      _
    $region29: #{tpu_custom_call.1} parent=1 // pred_fallthru
      _
    // Predicated region
    $region30: #{tpu_custom_call.1} parent=1 // pred_check
      _
    $region31: #{tpu_custom_call.1} parent=1 // pred_check_branch
      %56 = sbr.rel (0) target = $region33
    $region32: #{tpu_custom_call.1} parent=1 // pred_region
      %s58 = ssub.s32 512, 512
      %59 = vsyncadd [#allocation6], %s58
      %s60 = sshll.u32 [#allocation7], 4
      %s61 = int_to_ptr.vmem [resolvable:$true] %s60
      %66 = dma.hbm_to_vmem [thread:$0]  %s7, 512, %s61, [#allocation6], 128, 128, 8
    $region33: #{tpu_custom_call.1} parent=1 // pred_fallthru
      _
    // Predicated region
    $region34: #{tpu_custom_call.1} parent=1 // pred_check
      _
    $region35: #{tpu_custom_call.1} parent=1 // pred_check_branch
      %68 = sbr.rel (0) target = $region37
    $region36: #{tpu_custom_call.1} parent=1 // pred_region
      _
    $region37: #{tpu_custom_call.1} parent=1 // pred_fallthru
      _
    // Predicated region
    $region38: #{tpu_custom_call.1} parent=1 // pred_check
      _
    $region39: #{tpu_custom_call.1} parent=1 // pred_check_branch
      %70 = sbr.rel (0) target = $region41
    $region40: #{tpu_custom_call.1} parent=1 // pred_region
      %s72 = ssub.s32 512, 512
      %73 = vsyncadd [#allocation9], %s72
      %s74 = sshll.u32 [#allocation8], 4
      %s75 = int_to_ptr.vmem [resolvable:$true] %s74
      %80 = dma.hbm_to_vmem [thread:$0]  %s9, 512, %s75, [#allocation9], 128, 128, 8
    $region41: #{tpu_custom_call.1} parent=1 // pred_fallthru
      _
    // Predicated region
    $region42: #{tpu_custom_call.1} parent=1 // pred_check
      _
    $region43: #{tpu_custom_call.1} parent=1 // pred_check_branch
      %82 = sbr.rel (0) target = $region45
    $region44: #{tpu_custom_call.1} parent=1 // pred_region
      _
    $region45: #{tpu_custom_call.1} parent=1 // pred_fallthru
      _
    // Predicated region
    $region46: #{tpu_custom_call.1} parent=1 // pred_check
      _
    $region47: #{tpu_custom_call.1} parent=1 // pred_check_branch
      %84 = sbr.rel (0) target = $region49
    $region48: #{tpu_custom_call.1} parent=1 // pred_region
      _
    $region49: #{tpu_custom_call.1} parent=1 // pred_fallthru
      _
    // Predicated region
    $region50: #{tpu_custom_call.1} parent=1 // pred_check
      _
    $region51: #{tpu_custom_call.1} parent=1 // pred_check_branch
      %86 = sbr.rel (0) target = $region53
    $region52: #{tpu_custom_call.1} parent=1 // pred_region
      %87 = dma.done [#allocation4], 2048
    $region53: #{tpu_custom_call.1} parent=1 // pred_fallthru
      _
    // Predicated region
    $region54: #{tpu_custom_call.1} parent=1 // pred_check
      _
    $region55: #{tpu_custom_call.1} parent=1 // pred_check_branch
      %89 = sbr.rel (0) target = $region57
    $region56: #{tpu_custom_call.1} parent=1 // pred_region
      %90 = dma.done [#allocation6], 512
    $region57: #{tpu_custom_call.1} parent=1 // pred_fallthru
      _
    // Predicated region
    $region58: #{tpu_custom_call.1} parent=1 // pred_check
      _
    $region59: #{tpu_custom_call.1} parent=1 // pred_check_branch
      %92 = sbr.rel (0) target = $region61
    $region60: #{tpu_custom_call.1} parent=1 // pred_region
      %93 = dma.done [#allocation6], 512
    $region61: #{tpu_custom_call.1} parent=1 // pred_fallthru
      _
    // Predicated region
    $region62: #{tpu_custom_call.1} parent=1 // pred_check
      _
    $region63: #{tpu_custom_call.1} parent=1 // pred_check_branch
      %95 = sbr.rel (0) target = $region65
    $region64: #{tpu_custom_call.1} parent=1 // pred_region
      %96 = dma.done [#allocation9], 512
    $region65: #{tpu_custom_call.1} parent=1 // pred_fallthru
      _
    %v97 = vld [vmem:[%s0] sm:$0xff]
    %v98 = vld [vmem:[%s0 + $0x8] sm:$0xff]
    %v99 = vld [vmem:[%s0 + $0x10] sm:$0xff]
    %v100 = vld [vmem:[%s0 + $0x18] sm:$0xff]
    %v101 = vld [vmem:[%s0 + $0x20] sm:$0xff]
    %v102 = vld [vmem:[%s0 + $0x28] sm:$0xff]
    %v103 = vld [vmem:[%s0 + $0x30] sm:$0xff]
    %v104 = vld [vmem:[%s0 + $0x38] sm:$0xff]
    %v105 = vld [vmem:[%s0 + $0x40] sm:$0xff]
    %v106 = vld [vmem:[%s0 + $0x48] sm:$0xff]
    %v107 = vld [vmem:[%s0 + $0x50] sm:$0xff]
    %v108 = vld [vmem:[%s0 + $0x58] sm:$0xff]
    %v109 = vld [vmem:[%s0 + $0x60] sm:$0xff]
    %v110 = vld [vmem:[%s0 + $0x68] sm:$0xff]
    %v111 = vld [vmem:[%s0 + $0x70] sm:$0xff]
    %v112 = vld [vmem:[%s0 + $0x78] sm:$0xff]
    %v113 = vld [vmem:[%s1] sm:$0xff]
    %v114 = vld [vmem:[%s1 + $0x8] sm:$0xff]
    %v115 = vld [vmem:[%s1 + $0x10] sm:$0xff]
    %v116 = vld [vmem:[%s1 + $0x18] sm:$0xff]
    %v117 = vld [vmem:[%s1 + $0x20] sm:$0xff]
    %v118 = vld [vmem:[%s1 + $0x28] sm:$0xff]
    %v119 = vld [vmem:[%s1 + $0x30] sm:$0xff]
    %v120 = vld [vmem:[%s1 + $0x38] sm:$0xff]
    %v121 = vld [vmem:[%s1 + $0x40] sm:$0xff]
    %v122 = vld [vmem:[%s1 + $0x48] sm:$0xff]
    %v123 = vld [vmem:[%s1 + $0x50] sm:$0xff]
    %v124 = vld [vmem:[%s1 + $0x58] sm:$0xff]
    %v125 = vld [vmem:[%s1 + $0x60] sm:$0xff]
    %v126 = vld [vmem:[%s1 + $0x68] sm:$0xff]
    %v127 = vld [vmem:[%s1 + $0x70] sm:$0xff]
    %v128 = vld [vmem:[%s1 + $0x78] sm:$0xff]
    %v129 = vld [vmem:[%s3] sm:$0xff]
    %v130 = vld [vmem:[%s3 + $0x8] sm:$0xff]
    %v131 = vld [vmem:[%s3 + $0x10] sm:$0xff]
    %v132 = vld [vmem:[%s3 + $0x18] sm:$0xff]
    %v133 = vld [vmem:[%s4] sm:$0x1]
    %v134 = vld [vmem:[#allocation5] sm:$0xff]
    %v135 = vld [vmem:[#allocation5 + $0x8] sm:$0xff]
    %v136 = vld [vmem:[#allocation5 + $0x10] sm:$0xff]
    %v137 = vld [vmem:[#allocation5 + $0x18] sm:$0xff]
    %v138 = vld [vmem:[%s6] sm:$0x1]
    %vm139 = vcmask 261120
    %v141 = vsel %vm139, %v97, 0
    %v144 = vsel %vm139, %v98, 0
    %v147 = vsel %vm139, %v99, 0
    %v150 = vsel %vm139, %v100, 0
    %v153 = vsel %vm139, %v101, 0
    %v156 = vsel %vm139, %v102, 0
    %v159 = vsel %vm139, %v103, 0
    %v162 = vsel %vm139, %v104, 0
    %v165 = vsel %vm139, %v105, 0
    %v168 = vsel %vm139, %v106, 0
    %v171 = vsel %vm139, %v107, 0
    %v174 = vsel %vm139, %v108, 0
    %v177 = vsel %vm139, %v109, 0
    %v180 = vsel %vm139, %v110, 0
    %v183 = vsel %vm139, %v111, 0
    %v186 = vsel %vm139, %v112, 0
    %188 = vmatprep.subr.mxu0 0.0
    %189 = vmatpush1.msra.mxu0 0.0
    %190 = vmatprep.subr.mxu0 0.0
    %191 = vmatpush1.msra.mxu0 0.0
    %192 = vmatprep.subr.mxu0 0.0
    %193 = vmatpush1.msra.mxu0 0.0
    %194 = vmatprep.subr.mxu0 0.0
    %195 = vmatpush1.msra.mxu0 0.0
    %196 = vmatprep.subr.mxu0 0.0
    %197 = vmatpush1.msra.mxu0 0.0
    %198 = vmatprep.subr.mxu0 0.0
    %199 = vmatpush1.msra.mxu0 0.0
    %200 = vmatprep.subr.mxu0 0.0
    %201 = vmatpush1.msra.mxu0 0.0
    %202 = vmatprep.subr.mxu0 0.0
    %203 = vmatpush1.msra.mxu0 0.0
    %204 = vmatprep.subr.mxu0 0.0
    %205 = vmatpush1.msra.mxu0 0.0
    %206 = vmatprep.subr.mxu0 0.0
    %207 = vmatpush1.msra.mxu0 0.0
    %208 = vmatprep.subr.mxu0 0.0
    %209 = vmatpush1.msra.mxu0 0.0
    %210 = vmatprep.subr.mxu0 0.0
    %211 = vmatpush1.msra.mxu0 0.0
    %212 = vmatprep.subr.mxu0 0.0
    %213 = vmatpush1.msra.mxu0 %v132
    %214 = vmatprep.subr.mxu0 0.0
    %215 = vmatpush1.msra.mxu0 %v131
    %216 = vmatprep.subr.mxu0 0.0
    %217 = vmatpush1.msra.mxu0 %v130
    %218 = vmatprep.subr.mxu0 0.0
    %219 = vmatpush1.msra.mxu0 %v129
    %220 = vmatprep.subr.mxu0 0.0
    %221 = vmatpush2.msra.mxu0 0.0
    %222 = vmatprep.subr.mxu0 0.0
    %223 = vmatpush2.msra.mxu0 0.0
    %224 = vmatprep.subr.mxu0 0.0
    %225 = vmatpush2.msra.mxu0 0.0
    %226 = vmatprep.subr.mxu0 0.0
    %227 = vmatpush2.msra.mxu0 0.0
    %228 = vmatprep.subr.mxu0 0.0
    %229 = vmatpush2.msra.mxu0 0.0
    %230 = vmatprep.subr.mxu0 0.0
    %231 = vmatpush2.msra.mxu0 0.0
    %232 = vmatprep.subr.mxu0 0.0
    %233 = vmatpush2.msra.mxu0 0.0
    %234 = vmatprep.subr.mxu0 0.0
    %235 = vmatpush2.msra.mxu0 0.0
    %236 = vmatprep.subr.mxu0 0.0
    %237 = vmatpush2.msra.mxu0 0.0
    %238 = vmatprep.subr.mxu0 0.0
    %239 = vmatpush2.msra.mxu0 0.0
    %240 = vmatprep.subr.mxu0 0.0
    %241 = vmatpush2.msra.mxu0 0.0
    %242 = vmatprep.subr.mxu0 0.0
    %243 = vmatpush2.msra.mxu0 0.0
    %244 = vmatprep.subr.mxu0 0.0
    %245 = vmatpush2.msra.mxu0 0.0
    %246 = vmatprep.subr.mxu0 0.0
    %247 = vmatpush2.msra.mxu0 0.0
    %248 = vmatprep.subr.mxu0 0.0
    %249 = vmatpush2.msra.mxu0 0.0
    %250 = vmatprep.subr.mxu0 0.0
    %251 = vmatpush2.msra.mxu0 0.0
    %252 = vmatprep.mubr.f32.mxu0 0.0
    %253 = vmatmul.mubr.f32.gmra.mxu0 %v141
    %v254 = vpop.f32.mrf.mxu0
    %v255 = vadd.f32 0.0, %v254
    %v256 = vpop.f32.mrf.mxu0
    %257 = vmatprep.mubr.f32.mxu0 0.0
    %258 = vmatmul.mubr.f32.gmra.mxu0 %v144
    %v259 = vpop.f32.mrf.mxu0
    %v260 = vadd.f32 0.0, %v259
    %v261 = vpop.f32.mrf.mxu0
    %262 = vmatprep.mubr.f32.mxu0 0.0
    %263 = vmatmul.mubr.f32.gmra.mxu0 %v147
    %v264 = vpop.f32.mrf.mxu0
    %v265 = vadd.f32 0.0, %v264
    %v266 = vpop.f32.mrf.mxu0
    %267 = vmatprep.mubr.f32.mxu0 0.0
    %268 = vmatmul.mubr.f32.gmra.mxu0 %v150
    %v269 = vpop.f32.mrf.mxu0
    %v270 = vadd.f32 0.0, %v269
    %v271 = vpop.f32.mrf.mxu0
    %272 = vmatprep.mubr.f32.mxu0 0.0
    %273 = vmatmul.mubr.f32.gmra.mxu0 %v153
    %v274 = vpop.f32.mrf.mxu0
    %v275 = vadd.f32 0.0, %v274
    %v276 = vpop.f32.mrf.mxu0
    %277 = vmatprep.mubr.f32.mxu0 0.0
    %278 = vmatmul.mubr.f32.gmra.mxu0 %v156
    %v279 = vpop.f32.mrf.mxu0
    %v280 = vadd.f32 0.0, %v279
    %v281 = vpop.f32.mrf.mxu0
    %282 = vmatprep.mubr.f32.mxu0 0.0
    %283 = vmatmul.mubr.f32.gmra.mxu0 %v159
    %v284 = vpop.f32.mrf.mxu0
    %v285 = vadd.f32 0.0, %v284
    %v286 = vpop.f32.mrf.mxu0
    %287 = vmatprep.mubr.f32.mxu0 0.0
    %288 = vmatmul.mubr.f32.gmra.mxu0 %v162
    %v289 = vpop.f32.mrf.mxu0
    %v290 = vadd.f32 0.0, %v289
    %v291 = vpop.f32.mrf.mxu0
    %292 = vmatprep.mubr.f32.mxu0 0.0
    %293 = vmatmul.mubr.f32.gmra.mxu0 %v165
    %v294 = vpop.f32.mrf.mxu0
    %v295 = vadd.f32 0.0, %v294
    %v296 = vpop.f32.mrf.mxu0
    %297 = vmatprep.mubr.f32.mxu0 0.0
    %298 = vmatmul.mubr.f32.gmra.mxu0 %v168
    %v299 = vpop.f32.mrf.mxu0
    %v300 = vadd.f32 0.0, %v299
    %v301 = vpop.f32.mrf.mxu0
    %302 = vmatprep.mubr.f32.mxu0 0.0
    %303 = vmatmul.mubr.f32.gmra.mxu0 %v171
    %v304 = vpop.f32.mrf.mxu0
    %v305 = vadd.f32 0.0, %v304
    %v306 = vpop.f32.mrf.mxu0
    %307 = vmatprep.mubr.f32.mxu0 0.0
    %308 = vmatmul.mubr.f32.gmra.mxu0 %v174
    %v309 = vpop.f32.mrf.mxu0
    %v310 = vadd.f32 0.0, %v309
    %v311 = vpop.f32.mrf.mxu0
    %312 = vmatprep.mubr.f32.mxu0 0.0
    %313 = vmatmul.mubr.f32.gmra.mxu0 %v177
    %v314 = vpop.f32.mrf.mxu0
    %v315 = vadd.f32 0.0, %v314
    %v316 = vpop.f32.mrf.mxu0
    %317 = vmatprep.mubr.f32.mxu0 0.0
    %318 = vmatmul.mubr.f32.gmra.mxu0 %v180
    %v319 = vpop.f32.mrf.mxu0
    %v320 = vadd.f32 0.0, %v319
    %v321 = vpop.f32.mrf.mxu0
    %322 = vmatprep.mubr.f32.mxu0 0.0
    %323 = vmatmul.mubr.f32.gmra.mxu0 %v183
    %v324 = vpop.f32.mrf.mxu0
    %v325 = vadd.f32 0.0, %v324
    %v326 = vpop.f32.mrf.mxu0
    %327 = vmatprep.mubr.f32.mxu0 0.0
    %328 = vmatmul.mubr.f32.gmra.mxu0 %v186
    %v329 = vpop.f32.mrf.mxu0
    %v330 = vadd.f32 0.0, %v329
    %v331 = vpop.f32.mrf.mxu0
    %332 = vdwg.mxu0
    %v334 = vlaneseq
    %v335 = vshrl.u32 %v334, 7
    %v336 = vsub.s32 0, %v335
    %v337 = vrot.slane %v133, %v336
    %339 = vmatprep.subr.mxu0 0.0
    %340 = vmatpush1.msra.mxu0 %v330
    %341 = vmatprep.subr.mxu0 0.0
    %342 = vmatpush1.msra.mxu0 %v325
    %343 = vmatprep.subr.mxu0 0.0
    %344 = vmatpush1.msra.mxu0 %v320
    %345 = vmatprep.subr.mxu0 0.0
    %346 = vmatpush1.msra.mxu0 %v315
    %347 = vmatprep.subr.mxu0 0.0
    %348 = vmatpush1.msra.mxu0 %v310
    %349 = vmatprep.subr.mxu0 0.0
    %350 = vmatpush1.msra.mxu0 %v305
    %351 = vmatprep.subr.mxu0 0.0
    %352 = vmatpush1.msra.mxu0 %v300
    %353 = vmatprep.subr.mxu0 0.0
    %354 = vmatpush1.msra.mxu0 %v295
    %355 = vmatprep.subr.mxu0 0.0
    %356 = vmatpush1.msra.mxu0 %v290
    %357 = vmatprep.subr.mxu0 0.0
    %358 = vmatpush1.msra.mxu0 %v285
    %359 = vmatprep.subr.mxu0 0.0
    %360 = vmatpush1.msra.mxu0 %v280
    %361 = vmatprep.subr.mxu0 0.0
    %362 = vmatpush1.msra.mxu0 %v275
    %363 = vmatprep.subr.mxu0 0.0
    %364 = vmatpush1.msra.mxu0 %v270
    %365 = vmatprep.subr.mxu0 0.0
    %366 = vmatpush1.msra.mxu0 %v265
    %367 = vmatprep.subr.mxu0 0.0
    %368 = vmatpush1.msra.mxu0 %v260
    %369 = vmatprep.subr.mxu0 0.0
    %370 = vmatpush1.msra.mxu0 %v255
    %371 = vmatprep.subr.mxu0 0.0
    %372 = vmatpush2.msra.mxu0 0.0
    %373 = vmatprep.subr.mxu0 0.0
    %374 = vmatpush2.msra.mxu0 0.0
    %375 = vmatprep.subr.mxu0 0.0
    %376 = vmatpush2.msra.mxu0 0.0
    %377 = vmatprep.subr.mxu0 0.0
    %378 = vmatpush2.msra.mxu0 0.0
    %379 = vmatprep.subr.mxu0 0.0
    %380 = vmatpush2.msra.mxu0 0.0
    %381 = vmatprep.subr.mxu0 0.0
    %382 = vmatpush2.msra.mxu0 0.0
    %383 = vmatprep.subr.mxu0 0.0
    %384 = vmatpush2.msra.mxu0 0.0
    %385 = vmatprep.subr.mxu0 0.0
    %386 = vmatpush2.msra.mxu0 0.0
    %387 = vmatprep.subr.mxu0 0.0
    %388 = vmatpush2.msra.mxu0 0.0
    %389 = vmatprep.subr.mxu0 0.0
    %390 = vmatpush2.msra.mxu0 0.0
    %391 = vmatprep.subr.mxu0 0.0
    %392 = vmatpush2.msra.mxu0 0.0
    %393 = vmatprep.subr.mxu0 0.0
    %394 = vmatpush2.msra.mxu0 0.0
    %395 = vmatprep.subr.mxu0 0.0
    %396 = vmatpush2.msra.mxu0 0.0
    %397 = vmatprep.subr.mxu0 0.0
    %398 = vmatpush2.msra.mxu0 0.0
    %399 = vmatprep.subr.mxu0 0.0
    %400 = vmatpush2.msra.mxu0 0.0
    %401 = vmatprep.subr.mxu0 0.0
    %402 = vmatpush2.msra.mxu0 0.0
    %403 = vmatprep.mubr.f32.mxu0 0.0
    %404 = vmatmul.mubr.f32.gmra.mxu0 %v113
    %v405 = vpop.f32.mrf.mxu0
    %v406 = vadd.f32 %v337, %v405
    %v407 = vpop.f32.mrf.mxu0
    %408 = vmatprep.mubr.f32.mxu0 0.0
    %409 = vmatmul.mubr.f32.gmra.mxu0 %v114
    %v410 = vpop.f32.mrf.mxu0
    %v411 = vadd.f32 %v337, %v410
    %v412 = vpop.f32.mrf.mxu0
    %413 = vmatprep.mubr.f32.mxu0 0.0
    %414 = vmatmul.mubr.f32.gmra.mxu0 %v115
    %v415 = vpop.f32.mrf.mxu0
    %v416 = vadd.f32 %v337, %v415
    %v417 = vpop.f32.mrf.mxu0
    %418 = vmatprep.mubr.f32.mxu0 0.0
    %419 = vmatmul.mubr.f32.gmra.mxu0 %v116
    %v420 = vpop.f32.mrf.mxu0
    %v421 = vadd.f32 %v337, %v420
    %v422 = vpop.f32.mrf.mxu0
    %423 = vmatprep.mubr.f32.mxu0 0.0
    %424 = vmatmul.mubr.f32.gmra.mxu0 %v117
    %v425 = vpop.f32.mrf.mxu0
    %v426 = vadd.f32 %v337, %v425
    %v427 = vpop.f32.mrf.mxu0
    %428 = vmatprep.mubr.f32.mxu0 0.0
    %429 = vmatmul.mubr.f32.gmra.mxu0 %v118
    %v430 = vpop.f32.mrf.mxu0
    %v431 = vadd.f32 %v337, %v430
    %v432 = vpop.f32.mrf.mxu0
    %433 = vmatprep.mubr.f32.mxu0 0.0
    %434 = vmatmul.mubr.f32.gmra.mxu0 %v119
    %v435 = vpop.f32.mrf.mxu0
    %v436 = vadd.f32 %v337, %v435
    %v437 = vpop.f32.mrf.mxu0
    %438 = vmatprep.mubr.f32.mxu0 0.0
    %439 = vmatmul.mubr.f32.gmra.mxu0 %v120
    %v440 = vpop.f32.mrf.mxu0
    %v441 = vadd.f32 %v337, %v440
    %v442 = vpop.f32.mrf.mxu0
    %443 = vmatprep.mubr.f32.mxu0 0.0
    %444 = vmatmul.mubr.f32.gmra.mxu0 %v121
    %v445 = vpop.f32.mrf.mxu0
    %v446 = vadd.f32 %v337, %v445
    %v447 = vpop.f32.mrf.mxu0
    %448 = vmatprep.mubr.f32.mxu0 0.0
    %449 = vmatmul.mubr.f32.gmra.mxu0 %v122
    %v450 = vpop.f32.mrf.mxu0
    %v451 = vadd.f32 %v337, %v450
    %v452 = vpop.f32.mrf.mxu0
    %453 = vmatprep.mubr.f32.mxu0 0.0
    %454 = vmatmul.mubr.f32.gmra.mxu0 %v123
    %v455 = vpop.f32.mrf.mxu0
    %v456 = vadd.f32 %v337, %v455
    %v457 = vpop.f32.mrf.mxu0
    %458 = vmatprep.mubr.f32.mxu0 0.0
    %459 = vmatmul.mubr.f32.gmra.mxu0 %v124
    %v460 = vpop.f32.mrf.mxu0
    %v461 = vadd.f32 %v337, %v460
    %v462 = vpop.f32.mrf.mxu0
    %463 = vmatprep.mubr.f32.mxu0 0.0
    %464 = vmatmul.mubr.f32.gmra.mxu0 %v125
    %v465 = vpop.f32.mrf.mxu0
    %v466 = vadd.f32 %v337, %v465
    %v467 = vpop.f32.mrf.mxu0
    %468 = vmatprep.mubr.f32.mxu0 0.0
    %469 = vmatmul.mubr.f32.gmra.mxu0 %v126
    %v470 = vpop.f32.mrf.mxu0
    %v471 = vadd.f32 %v337, %v470
    %v472 = vpop.f32.mrf.mxu0
    %473 = vmatprep.mubr.f32.mxu0 0.0
    %474 = vmatmul.mubr.f32.gmra.mxu0 %v127
    %v475 = vpop.f32.mrf.mxu0
    %v476 = vadd.f32 %v337, %v475
    %v477 = vpop.f32.mrf.mxu0
    %478 = vmatprep.mubr.f32.mxu0 0.0
    %479 = vmatmul.mubr.f32.gmra.mxu0 %v128
    %v480 = vpop.f32.mrf.mxu0
    %v481 = vadd.f32 %v337, %v480
    %v482 = vpop.f32.mrf.mxu0
    %483 = vdwg.mxu0
    %v484 = vmax.f32 %v406, 0.0
    %v485 = vmax.f32 %v411, 0.0
    %v486 = vmax.f32 %v416, 0.0
    %v487 = vmax.f32 %v421, 0.0
    %v488 = vmax.f32 %v426, 0.0
    %v489 = vmax.f32 %v431, 0.0
    %v490 = vmax.f32 %v436, 0.0
    %v491 = vmax.f32 %v441, 0.0
    %v492 = vmax.f32 %v446, 0.0
    %v493 = vmax.f32 %v451, 0.0
    %v494 = vmax.f32 %v456, 0.0
    %v495 = vmax.f32 %v461, 0.0
    %v496 = vmax.f32 %v466, 0.0
    %v497 = vmax.f32 %v471, 0.0
    %v498 = vmax.f32 %v476, 0.0
    %v499 = vmax.f32 %v481, 0.0
    %v501 = vsel %vm139, %v484, 0
    %v504 = vsel %vm139, %v485, 0
    %v507 = vsel %vm139, %v486, 0
    %v510 = vsel %vm139, %v487, 0
    %v513 = vsel %vm139, %v488, 0
    %v516 = vsel %vm139, %v489, 0
    %v519 = vsel %vm139, %v490, 0
    %v522 = vsel %vm139, %v491, 0
    %v525 = vsel %vm139, %v492, 0
    %v528 = vsel %vm139, %v493, 0
    %v531 = vsel %vm139, %v494, 0
    %v534 = vsel %vm139, %v495, 0
    %v537 = vsel %vm139, %v496, 0
    %v540 = vsel %vm139, %v497, 0
    %v543 = vsel %vm139, %v498, 0
    %v546 = vsel %vm139, %v499, 0
    %548 = vmatprep.subr.mxu0 0.0
    %549 = vmatpush1.msra.mxu0 0.0
    %550 = vmatprep.subr.mxu0 0.0
    %551 = vmatpush1.msra.mxu0 0.0
    %552 = vmatprep.subr.mxu0 0.0
    %553 = vmatpush1.msra.mxu0 0.0
    %554 = vmatprep.subr.mxu0 0.0
    %555 = vmatpush1.msra.mxu0 0.0
    %556 = vmatprep.subr.mxu0 0.0
    %557 = vmatpush1.msra.mxu0 0.0
    %558 = vmatprep.subr.mxu0 0.0
    %559 = vmatpush1.msra.mxu0 0.0
    %560 = vmatprep.subr.mxu0 0.0
    %561 = vmatpush1.msra.mxu0 0.0
    %562 = vmatprep.subr.mxu0 0.0
    %563 = vmatpush1.msra.mxu0 0.0
    %564 = vmatprep.subr.mxu0 0.0
    %565 = vmatpush1.msra.mxu0 0.0
    %566 = vmatprep.subr.mxu0 0.0
    %567 = vmatpush1.msra.mxu0 0.0
    %568 = vmatprep.subr.mxu0 0.0
    %569 = vmatpush1.msra.mxu0 0.0
    %570 = vmatprep.subr.mxu0 0.0
    %571 = vmatpush1.msra.mxu0 0.0
    %572 = vmatprep.subr.mxu0 0.0
    %573 = vmatpush1.msra.mxu0 %v137
    %574 = vmatprep.subr.mxu0 0.0
    %575 = vmatpush1.msra.mxu0 %v136
    %576 = vmatprep.subr.mxu0 0.0
    %577 = vmatpush1.msra.mxu0 %v135
    %578 = vmatprep.subr.mxu0 0.0
    %579 = vmatpush1.msra.mxu0 %v134
    %580 = vmatprep.subr.mxu0 0.0
    %581 = vmatpush2.msra.mxu0 0.0
    %582 = vmatprep.subr.mxu0 0.0
    %583 = vmatpush2.msra.mxu0 0.0
    %584 = vmatprep.subr.mxu0 0.0
    %585 = vmatpush2.msra.mxu0 0.0
    %586 = vmatprep.subr.mxu0 0.0
    %587 = vmatpush2.msra.mxu0 0.0
    %588 = vmatprep.subr.mxu0 0.0
    %589 = vmatpush2.msra.mxu0 0.0
    %590 = vmatprep.subr.mxu0 0.0
    %591 = vmatpush2.msra.mxu0 0.0
    %592 = vmatprep.subr.mxu0 0.0
    %593 = vmatpush2.msra.mxu0 0.0
    %594 = vmatprep.subr.mxu0 0.0
    %595 = vmatpush2.msra.mxu0 0.0
    %596 = vmatprep.subr.mxu0 0.0
    %597 = vmatpush2.msra.mxu0 0.0
    %598 = vmatprep.subr.mxu0 0.0
    %599 = vmatpush2.msra.mxu0 0.0
    %600 = vmatprep.subr.mxu0 0.0
    %601 = vmatpush2.msra.mxu0 0.0
    %602 = vmatprep.subr.mxu0 0.0
    %603 = vmatpush2.msra.mxu0 0.0
    %604 = vmatprep.subr.mxu0 0.0
    %605 = vmatpush2.msra.mxu0 0.0
    %606 = vmatprep.subr.mxu0 0.0
    %607 = vmatpush2.msra.mxu0 0.0
    %608 = vmatprep.subr.mxu0 0.0
    %609 = vmatpush2.msra.mxu0 0.0
    %610 = vmatprep.subr.mxu0 0.0
    %611 = vmatpush2.msra.mxu0 0.0
    %612 = vmatprep.mubr.f32.mxu0 0.0
    %613 = vmatmul.mubr.f32.gmra.mxu0 %v501
    %v614 = vpop.f32.mrf.mxu0
    %v615 = vadd.f32 0.0, %v614
    %v616 = vpop.f32.mrf.mxu0
    %617 = vmatprep.mubr.f32.mxu0 0.0
    %618 = vmatmul.mubr.f32.gmra.mxu0 %v504
    %v619 = vpop.f32.mrf.mxu0
    %v620 = vadd.f32 0.0, %v619
    %v621 = vpop.f32.mrf.mxu0
    %622 = vmatprep.mubr.f32.mxu0 0.0
    %623 = vmatmul.mubr.f32.gmra.mxu0 %v507
    %v624 = vpop.f32.mrf.mxu0
    %v625 = vadd.f32 0.0, %v624
    %v626 = vpop.f32.mrf.mxu0
    %627 = vmatprep.mubr.f32.mxu0 0.0
    %628 = vmatmul.mubr.f32.gmra.mxu0 %v510
    %v629 = vpop.f32.mrf.mxu0
    %v630 = vadd.f32 0.0, %v629
    %v631 = vpop.f32.mrf.mxu0
    %632 = vmatprep.mubr.f32.mxu0 0.0
    %633 = vmatmul.mubr.f32.gmra.mxu0 %v513
    %v634 = vpop.f32.mrf.mxu0
    %v635 = vadd.f32 0.0, %v634
    %v636 = vpop.f32.mrf.mxu0
    %637 = vmatprep.mubr.f32.mxu0 0.0
    %638 = vmatmul.mubr.f32.gmra.mxu0 %v516
    %v639 = vpop.f32.mrf.mxu0
    %v640 = vadd.f32 0.0, %v639
    %v641 = vpop.f32.mrf.mxu0
    %642 = vmatprep.mubr.f32.mxu0 0.0
    %643 = vmatmul.mubr.f32.gmra.mxu0 %v519
    %v644 = vpop.f32.mrf.mxu0
    %v645 = vadd.f32 0.0, %v644
    %v646 = vpop.f32.mrf.mxu0
    %647 = vmatprep.mubr.f32.mxu0 0.0
    %648 = vmatmul.mubr.f32.gmra.mxu0 %v522
    %v649 = vpop.f32.mrf.mxu0
    %v650 = vadd.f32 0.0, %v649
    %v651 = vpop.f32.mrf.mxu0
    %652 = vmatprep.mubr.f32.mxu0 0.0
    %653 = vmatmul.mubr.f32.gmra.mxu0 %v525
    %v654 = vpop.f32.mrf.mxu0
    %v655 = vadd.f32 0.0, %v654
    %v656 = vpop.f32.mrf.mxu0
    %657 = vmatprep.mubr.f32.mxu0 0.0
    %658 = vmatmul.mubr.f32.gmra.mxu0 %v528
    %v659 = vpop.f32.mrf.mxu0
    %v660 = vadd.f32 0.0, %v659
    %v661 = vpop.f32.mrf.mxu0
    %662 = vmatprep.mubr.f32.mxu0 0.0
    %663 = vmatmul.mubr.f32.gmra.mxu0 %v531
    %v664 = vpop.f32.mrf.mxu0
    %v665 = vadd.f32 0.0, %v664
    %v666 = vpop.f32.mrf.mxu0
    %667 = vmatprep.mubr.f32.mxu0 0.0
    %668 = vmatmul.mubr.f32.gmra.mxu0 %v534
    %v669 = vpop.f32.mrf.mxu0
    %v670 = vadd.f32 0.0, %v669
    %v671 = vpop.f32.mrf.mxu0
    %672 = vmatprep.mubr.f32.mxu0 0.0
    %673 = vmatmul.mubr.f32.gmra.mxu0 %v537
    %v674 = vpop.f32.mrf.mxu0
    %v675 = vadd.f32 0.0, %v674
    %v676 = vpop.f32.mrf.mxu0
    %677 = vmatprep.mubr.f32.mxu0 0.0
    %678 = vmatmul.mubr.f32.gmra.mxu0 %v540
    %v679 = vpop.f32.mrf.mxu0
    %v680 = vadd.f32 0.0, %v679
    %v681 = vpop.f32.mrf.mxu0
    %682 = vmatprep.mubr.f32.mxu0 0.0
    %683 = vmatmul.mubr.f32.gmra.mxu0 %v543
    %v684 = vpop.f32.mrf.mxu0
    %v685 = vadd.f32 0.0, %v684
    %v686 = vpop.f32.mrf.mxu0
    %687 = vmatprep.mubr.f32.mxu0 0.0
    %688 = vmatmul.mubr.f32.gmra.mxu0 %v546
    %v689 = vpop.f32.mrf.mxu0
    %v690 = vadd.f32 0.0, %v689
    %v691 = vpop.f32.mrf.mxu0
    %692 = vdwg.mxu0
    %v694 = vlaneseq
    %v695 = vshrl.u32 %v694, 7
    %v696 = vsub.s32 0, %v695
    %v697 = vrot.slane %v138, %v696
    %699 = vmatprep.subr.mxu0 0.0
    %700 = vmatpush1.msra.mxu0 %v690
    %701 = vmatprep.subr.mxu0 0.0
    %702 = vmatpush1.msra.mxu0 %v685
    %703 = vmatprep.subr.mxu0 0.0
    %704 = vmatpush1.msra.mxu0 %v680
    %705 = vmatprep.subr.mxu0 0.0
    %706 = vmatpush1.msra.mxu0 %v675
    %707 = vmatprep.subr.mxu0 0.0
    %708 = vmatpush1.msra.mxu0 %v670
    %709 = vmatprep.subr.mxu0 0.0
    %710 = vmatpush1.msra.mxu0 %v665
    %711 = vmatprep.subr.mxu0 0.0
    %712 = vmatpush1.msra.mxu0 %v660
    %713 = vmatprep.subr.mxu0 0.0
    %714 = vmatpush1.msra.mxu0 %v655
    %715 = vmatprep.subr.mxu0 0.0
    %716 = vmatpush1.msra.mxu0 %v650
    %717 = vmatprep.subr.mxu0 0.0
    %718 = vmatpush1.msra.mxu0 %v645
    %719 = vmatprep.subr.mxu0 0.0
    %720 = vmatpush1.msra.mxu0 %v640
    %721 = vmatprep.subr.mxu0 0.0
    %722 = vmatpush1.msra.mxu0 %v635
    %723 = vmatprep.subr.mxu0 0.0
    %724 = vmatpush1.msra.mxu0 %v630
    %725 = vmatprep.subr.mxu0 0.0
    %726 = vmatpush1.msra.mxu0 %v625
    %727 = vmatprep.subr.mxu0 0.0
    %728 = vmatpush1.msra.mxu0 %v620
    %729 = vmatprep.subr.mxu0 0.0
    %730 = vmatpush1.msra.mxu0 %v615
    %731 = vmatprep.subr.mxu0 0.0
    %732 = vmatpush2.msra.mxu0 0.0
    %733 = vmatprep.subr.mxu0 0.0
    %734 = vmatpush2.msra.mxu0 0.0
    %735 = vmatprep.subr.mxu0 0.0
    %736 = vmatpush2.msra.mxu0 0.0
    %737 = vmatprep.subr.mxu0 0.0
    %738 = vmatpush2.msra.mxu0 0.0
    %739 = vmatprep.subr.mxu0 0.0
    %740 = vmatpush2.msra.mxu0 0.0
    %741 = vmatprep.subr.mxu0 0.0
    %742 = vmatpush2.msra.mxu0 0.0
    %743 = vmatprep.subr.mxu0 0.0
    %744 = vmatpush2.msra.mxu0 0.0
    %745 = vmatprep.subr.mxu0 0.0
    %746 = vmatpush2.msra.mxu0 0.0
    %747 = vmatprep.subr.mxu0 0.0
    %748 = vmatpush2.msra.mxu0 0.0
    %749 = vmatprep.subr.mxu0 0.0
    %750 = vmatpush2.msra.mxu0 0.0
    %751 = vmatprep.subr.mxu0 0.0
    %752 = vmatpush2.msra.mxu0 0.0
    %753 = vmatprep.subr.mxu0 0.0
    %754 = vmatpush2.msra.mxu0 0.0
    %755 = vmatprep.subr.mxu0 0.0
    %756 = vmatpush2.msra.mxu0 0.0
    %757 = vmatprep.subr.mxu0 0.0
    %758 = vmatpush2.msra.mxu0 0.0
    %759 = vmatprep.subr.mxu0 0.0
    %760 = vmatpush2.msra.mxu0 0.0
    %761 = vmatprep.subr.mxu0 0.0
    %762 = vmatpush2.msra.mxu0 0.0
    %763 = vmatprep.mubr.f32.mxu0 0.0
    %764 = vmatmul.mubr.f32.gmra.mxu0 %v113
    %v765 = vpop.f32.mrf.mxu0
    %v766 = vadd.f32 %v697, %v765
    %v767 = vpop.f32.mrf.mxu0
    %768 = vmatprep.mubr.f32.mxu0 0.0
    %769 = vmatmul.mubr.f32.gmra.mxu0 %v114
    %v770 = vpop.f32.mrf.mxu0
    %v771 = vadd.f32 %v697, %v770
    %v772 = vpop.f32.mrf.mxu0
    %773 = vmatprep.mubr.f32.mxu0 0.0
    %774 = vmatmul.mubr.f32.gmra.mxu0 %v115
    %v775 = vpop.f32.mrf.mxu0
    %v776 = vadd.f32 %v697, %v775
    %v777 = vpop.f32.mrf.mxu0
    %778 = vmatprep.mubr.f32.mxu0 0.0
    %779 = vmatmul.mubr.f32.gmra.mxu0 %v116
    %v780 = vpop.f32.mrf.mxu0
    %v781 = vadd.f32 %v697, %v780
    %v782 = vpop.f32.mrf.mxu0
    %783 = vmatprep.mubr.f32.mxu0 0.0
    %784 = vmatmul.mubr.f32.gmra.mxu0 %v117
    %v785 = vpop.f32.mrf.mxu0
    %v786 = vadd.f32 %v697, %v785
    %v787 = vpop.f32.mrf.mxu0
    %788 = vmatprep.mubr.f32.mxu0 0.0
    %789 = vmatmul.mubr.f32.gmra.mxu0 %v118
    %v790 = vpop.f32.mrf.mxu0
    %v791 = vadd.f32 %v697, %v790
    %v792 = vpop.f32.mrf.mxu0
    %793 = vmatprep.mubr.f32.mxu0 0.0
    %794 = vmatmul.mubr.f32.gmra.mxu0 %v119
    %v795 = vpop.f32.mrf.mxu0
    %v796 = vadd.f32 %v697, %v795
    %v797 = vpop.f32.mrf.mxu0
    %798 = vmatprep.mubr.f32.mxu0 0.0
    %799 = vmatmul.mubr.f32.gmra.mxu0 %v120
    %v800 = vpop.f32.mrf.mxu0
    %v801 = vadd.f32 %v697, %v800
    %v802 = vpop.f32.mrf.mxu0
    %803 = vmatprep.mubr.f32.mxu0 0.0
    %804 = vmatmul.mubr.f32.gmra.mxu0 %v121
    %v805 = vpop.f32.mrf.mxu0
    %v806 = vadd.f32 %v697, %v805
    %v807 = vpop.f32.mrf.mxu0
    %808 = vmatprep.mubr.f32.mxu0 0.0
    %809 = vmatmul.mubr.f32.gmra.mxu0 %v122
    %v810 = vpop.f32.mrf.mxu0
    %v811 = vadd.f32 %v697, %v810
    %v812 = vpop.f32.mrf.mxu0
    %813 = vmatprep.mubr.f32.mxu0 0.0
    %814 = vmatmul.mubr.f32.gmra.mxu0 %v123
    %v815 = vpop.f32.mrf.mxu0
    %v816 = vadd.f32 %v697, %v815
    %v817 = vpop.f32.mrf.mxu0
    %818 = vmatprep.mubr.f32.mxu0 0.0
    %819 = vmatmul.mubr.f32.gmra.mxu0 %v124
    %v820 = vpop.f32.mrf.mxu0
    %v821 = vadd.f32 %v697, %v820
    %v822 = vpop.f32.mrf.mxu0
    %823 = vmatprep.mubr.f32.mxu0 0.0
    %824 = vmatmul.mubr.f32.gmra.mxu0 %v125
    %v825 = vpop.f32.mrf.mxu0
    %v826 = vadd.f32 %v697, %v825
    %v827 = vpop.f32.mrf.mxu0
    %828 = vmatprep.mubr.f32.mxu0 0.0
    %829 = vmatmul.mubr.f32.gmra.mxu0 %v126
    %v830 = vpop.f32.mrf.mxu0
    %v831 = vadd.f32 %v697, %v830
    %v832 = vpop.f32.mrf.mxu0
    %833 = vmatprep.mubr.f32.mxu0 0.0
    %834 = vmatmul.mubr.f32.gmra.mxu0 %v127
    %v835 = vpop.f32.mrf.mxu0
    %v836 = vadd.f32 %v697, %v835
    %v837 = vpop.f32.mrf.mxu0
    %838 = vmatprep.mubr.f32.mxu0 0.0
    %839 = vmatmul.mubr.f32.gmra.mxu0 %v128
    %v840 = vpop.f32.mrf.mxu0
    %v841 = vadd.f32 %v697, %v840
    %v842 = vpop.f32.mrf.mxu0
    %843 = vdwg.mxu0
    %v844 = vld [vmem:[#allocation3] sm:$0xff]
    %v845 = vld [vmem:[#allocation3 + $0x8] sm:$0xff]
    %v846 = vld [vmem:[#allocation3 + $0x10] sm:$0xff]
    %v847 = vld [vmem:[#allocation3 + $0x18] sm:$0xff]
    %v848 = vld [vmem:[#allocation3 + $0x20] sm:$0xff]
    %v849 = vld [vmem:[#allocation3 + $0x28] sm:$0xff]
    %v850 = vld [vmem:[#allocation3 + $0x30] sm:$0xff]
    %v851 = vld [vmem:[#allocation3 + $0x38] sm:$0xff]
    %v852 = vld [vmem:[#allocation3 + $0x40] sm:$0xff]
    %v853 = vld [vmem:[#allocation3 + $0x48] sm:$0xff]
    %v854 = vld [vmem:[#allocation3 + $0x50] sm:$0xff]
    %v855 = vld [vmem:[#allocation3 + $0x58] sm:$0xff]
    %v856 = vld [vmem:[#allocation3 + $0x60] sm:$0xff]
    %v857 = vld [vmem:[#allocation3 + $0x68] sm:$0xff]
    %v858 = vld [vmem:[#allocation3 + $0x70] sm:$0xff]
    %v859 = vld [vmem:[#allocation3 + $0x78] sm:$0xff]
    %v860 = vld [vmem:[#allocation7] sm:$0xff]
    %v861 = vld [vmem:[#allocation7 + $0x8] sm:$0xff]
    %v862 = vld [vmem:[#allocation7 + $0x10] sm:$0xff]
    %v863 = vld [vmem:[#allocation7 + $0x18] sm:$0xff]
    %v864 = vld [vmem:[%s8] sm:$0x1]
    %v865 = vld [vmem:[#allocation8] sm:$0xff]
    %v866 = vld [vmem:[#allocation8 + $0x8] sm:$0xff]
    %v867 = vld [vmem:[#allocation8 + $0x10] sm:$0xff]
    %v868 = vld [vmem:[#allocation8 + $0x18] sm:$0xff]
    %v869 = vld [vmem:[%s10] sm:$0x1]
    %870 = vmatprep.subr.mxu0 0.0
    %871 = vmatpush1.msra.mxu0 0.0
    %872 = vmatprep.subr.mxu0 0.0
    %873 = vmatpush1.msra.mxu0 0.0
    %874 = vmatprep.subr.mxu0 0.0
    %875 = vmatpush1.msra.mxu0 0.0
    %876 = vmatprep.subr.mxu0 0.0
    %877 = vmatpush1.msra.mxu0 0.0
    %878 = vmatprep.subr.mxu0 0.0
    %879 = vmatpush1.msra.mxu0 0.0
    %880 = vmatprep.subr.mxu0 0.0
    %881 = vmatpush1.msra.mxu0 0.0
    %882 = vmatprep.subr.mxu0 0.0
    %883 = vmatpush1.msra.mxu0 0.0
    %884 = vmatprep.subr.mxu0 0.0
    %885 = vmatpush1.msra.mxu0 0.0
    %886 = vmatprep.subr.mxu0 0.0
    %887 = vmatpush1.msra.mxu0 0.0
    %888 = vmatprep.subr.mxu0 0.0
    %889 = vmatpush1.msra.mxu0 0.0
    %890 = vmatprep.subr.mxu0 0.0
    %891 = vmatpush1.msra.mxu0 0.0
    %892 = vmatprep.subr.mxu0 0.0
    %893 = vmatpush1.msra.mxu0 0.0
    %894 = vmatprep.subr.mxu0 0.0
    %895 = vmatpush1.msra.mxu0 %v863
    %896 = vmatprep.subr.mxu0 0.0
    %897 = vmatpush1.msra.mxu0 %v862
    %898 = vmatprep.subr.mxu0 0.0
    %899 = vmatpush1.msra.mxu0 %v861
    %900 = vmatprep.subr.mxu0 0.0
    %901 = vmatpush1.msra.mxu0 %v860
    %902 = vmatprep.subr.mxu0 0.0
    %903 = vmatpush2.msra.mxu0 0.0
    %904 = vmatprep.subr.mxu0 0.0
    %905 = vmatpush2.msra.mxu0 0.0
    %906 = vmatprep.subr.mxu0 0.0
    %907 = vmatpush2.msra.mxu0 0.0
    %908 = vmatprep.subr.mxu0 0.0
    %909 = vmatpush2.msra.mxu0 0.0
    %910 = vmatprep.subr.mxu0 0.0
    %911 = vmatpush2.msra.mxu0 0.0
    %912 = vmatprep.subr.mxu0 0.0
    %913 = vmatpush2.msra.mxu0 0.0
    %914 = vmatprep.subr.mxu0 0.0
    %915 = vmatpush2.msra.mxu0 0.0
    %916 = vmatprep.subr.mxu0 0.0
    %917 = vmatpush2.msra.mxu0 0.0
    %918 = vmatprep.subr.mxu0 0.0
    %919 = vmatpush2.msra.mxu0 0.0
    %920 = vmatprep.subr.mxu0 0.0
    %921 = vmatpush2.msra.mxu0 0.0
    %922 = vmatprep.subr.mxu0 0.0
    %923 = vmatpush2.msra.mxu0 0.0
    %924 = vmatprep.subr.mxu0 0.0
    %925 = vmatpush2.msra.mxu0 0.0
    %926 = vmatprep.subr.mxu0 0.0
    %927 = vmatpush2.msra.mxu0 0.0
    %928 = vmatprep.subr.mxu0 0.0
    %929 = vmatpush2.msra.mxu0 0.0
    %930 = vmatprep.subr.mxu0 0.0
    %931 = vmatpush2.msra.mxu0 0.0
    %932 = vmatprep.subr.mxu0 0.0
    %933 = vmatpush2.msra.mxu0 0.0
    %934 = vmatprep.mubr.f32.mxu0 0.0
    %935 = vmatmul.mubr.f32.gmra.mxu0 %v141
    %v936 = vpop.f32.mrf.mxu0
    %v937 = vadd.f32 0.0, %v936
    %v938 = vpop.f32.mrf.mxu0
    %939 = vmatprep.mubr.f32.mxu0 0.0
    %940 = vmatmul.mubr.f32.gmra.mxu0 %v144
    %v941 = vpop.f32.mrf.mxu0
    %v942 = vadd.f32 0.0, %v941
    %v943 = vpop.f32.mrf.mxu0
    %944 = vmatprep.mubr.f32.mxu0 0.0
    %945 = vmatmul.mubr.f32.gmra.mxu0 %v147
    %v946 = vpop.f32.mrf.mxu0
    %v947 = vadd.f32 0.0, %v946
    %v948 = vpop.f32.mrf.mxu0
    %949 = vmatprep.mubr.f32.mxu0 0.0
    %950 = vmatmul.mubr.f32.gmra.mxu0 %v150
    %v951 = vpop.f32.mrf.mxu0
    %v952 = vadd.f32 0.0, %v951
    %v953 = vpop.f32.mrf.mxu0
    %954 = vmatprep.mubr.f32.mxu0 0.0
    %955 = vmatmul.mubr.f32.gmra.mxu0 %v153
    %v956 = vpop.f32.mrf.mxu0
    %v957 = vadd.f32 0.0, %v956
    %v958 = vpop.f32.mrf.mxu0
    %959 = vmatprep.mubr.f32.mxu0 0.0
    %960 = vmatmul.mubr.f32.gmra.mxu0 %v156
    %v961 = vpop.f32.mrf.mxu0
    %v962 = vadd.f32 0.0, %v961
    %v963 = vpop.f32.mrf.mxu0
    %964 = vmatprep.mubr.f32.mxu0 0.0
    %965 = vmatmul.mubr.f32.gmra.mxu0 %v159
    %v966 = vpop.f32.mrf.mxu0
    %v967 = vadd.f32 0.0, %v966
    %v968 = vpop.f32.mrf.mxu0
    %969 = vmatprep.mubr.f32.mxu0 0.0
    %970 = vmatmul.mubr.f32.gmra.mxu0 %v162
    %v971 = vpop.f32.mrf.mxu0
    %v972 = vadd.f32 0.0, %v971
    %v973 = vpop.f32.mrf.mxu0
    %974 = vmatprep.mubr.f32.mxu0 0.0
    %975 = vmatmul.mubr.f32.gmra.mxu0 %v165
    %v976 = vpop.f32.mrf.mxu0
    %v977 = vadd.f32 0.0, %v976
    %v978 = vpop.f32.mrf.mxu0
    %979 = vmatprep.mubr.f32.mxu0 0.0
    %980 = vmatmul.mubr.f32.gmra.mxu0 %v168
    %v981 = vpop.f32.mrf.mxu0
    %v982 = vadd.f32 0.0, %v981
    %v983 = vpop.f32.mrf.mxu0
    %984 = vmatprep.mubr.f32.mxu0 0.0
    %985 = vmatmul.mubr.f32.gmra.mxu0 %v171
    %v986 = vpop.f32.mrf.mxu0
    %v987 = vadd.f32 0.0, %v986
    %v988 = vpop.f32.mrf.mxu0
    %989 = vmatprep.mubr.f32.mxu0 0.0
    %990 = vmatmul.mubr.f32.gmra.mxu0 %v174
    %v991 = vpop.f32.mrf.mxu0
    %v992 = vadd.f32 0.0, %v991
    %v993 = vpop.f32.mrf.mxu0
    %994 = vmatprep.mubr.f32.mxu0 0.0
    %995 = vmatmul.mubr.f32.gmra.mxu0 %v177
    %v996 = vpop.f32.mrf.mxu0
    %v997 = vadd.f32 0.0, %v996
    %v998 = vpop.f32.mrf.mxu0
    %999 = vmatprep.mubr.f32.mxu0 0.0
    %1000 = vmatmul.mubr.f32.gmra.mxu0 %v180
    %v1001 = vpop.f32.mrf.mxu0
    %v1002 = vadd.f32 0.0, %v1001
    %v1003 = vpop.f32.mrf.mxu0
    %1004 = vmatprep.mubr.f32.mxu0 0.0
    %1005 = vmatmul.mubr.f32.gmra.mxu0 %v183
    %v1006 = vpop.f32.mrf.mxu0
    %v1007 = vadd.f32 0.0, %v1006
    %v1008 = vpop.f32.mrf.mxu0
    %1009 = vmatprep.mubr.f32.mxu0 0.0
    %1010 = vmatmul.mubr.f32.gmra.mxu0 %v186
    %v1011 = vpop.f32.mrf.mxu0
    %v1012 = vadd.f32 0.0, %v1011
    %v1013 = vpop.f32.mrf.mxu0
    %1014 = vdwg.mxu0
    %v1016 = vlaneseq
    %v1017 = vshrl.u32 %v1016, 7
    %v1018 = vsub.s32 0, %v1017
    %v1019 = vrot.slane %v864, %v1018
    %1021 = vmatprep.subr.mxu0 0.0
    %1022 = vmatpush1.msra.mxu0 %v1012
    %1023 = vmatprep.subr.mxu0 0.0
    %1024 = vmatpush1.msra.mxu0 %v1007
    %1025 = vmatprep.subr.mxu0 0.0
    %1026 = vmatpush1.msra.mxu0 %v1002
    %1027 = vmatprep.subr.mxu0 0.0
    %1028 = vmatpush1.msra.mxu0 %v997
    %1029 = vmatprep.subr.mxu0 0.0
    %1030 = vmatpush1.msra.mxu0 %v992
    %1031 = vmatprep.subr.mxu0 0.0
    %1032 = vmatpush1.msra.mxu0 %v987
    %1033 = vmatprep.subr.mxu0 0.0
    %1034 = vmatpush1.msra.mxu0 %v982
    %1035 = vmatprep.subr.mxu0 0.0
    %1036 = vmatpush1.msra.mxu0 %v977
    %1037 = vmatprep.subr.mxu0 0.0
    %1038 = vmatpush1.msra.mxu0 %v972
    %1039 = vmatprep.subr.mxu0 0.0
    %1040 = vmatpush1.msra.mxu0 %v967
    %1041 = vmatprep.subr.mxu0 0.0
    %1042 = vmatpush1.msra.mxu0 %v962
    %1043 = vmatprep.subr.mxu0 0.0
    %1044 = vmatpush1.msra.mxu0 %v957
    %1045 = vmatprep.subr.mxu0 0.0
    %1046 = vmatpush1.msra.mxu0 %v952
    %1047 = vmatprep.subr.mxu0 0.0
    %1048 = vmatpush1.msra.mxu0 %v947
    %1049 = vmatprep.subr.mxu0 0.0
    %1050 = vmatpush1.msra.mxu0 %v942
    %1051 = vmatprep.subr.mxu0 0.0
    %1052 = vmatpush1.msra.mxu0 %v937
    %1053 = vmatprep.subr.mxu0 0.0
    %1054 = vmatpush2.msra.mxu0 0.0
    %1055 = vmatprep.subr.mxu0 0.0
    %1056 = vmatpush2.msra.mxu0 0.0
    %1057 = vmatprep.subr.mxu0 0.0
    %1058 = vmatpush2.msra.mxu0 0.0
    %1059 = vmatprep.subr.mxu0 0.0
    %1060 = vmatpush2.msra.mxu0 0.0
    %1061 = vmatprep.subr.mxu0 0.0
    %1062 = vmatpush2.msra.mxu0 0.0
    %1063 = vmatprep.subr.mxu0 0.0
    %1064 = vmatpush2.msra.mxu0 0.0
    %1065 = vmatprep.subr.mxu0 0.0
    %1066 = vmatpush2.msra.mxu0 0.0
    %1067 = vmatprep.subr.mxu0 0.0
    %1068 = vmatpush2.msra.mxu0 0.0
    %1069 = vmatprep.subr.mxu0 0.0
    %1070 = vmatpush2.msra.mxu0 0.0
    %1071 = vmatprep.subr.mxu0 0.0
    %1072 = vmatpush2.msra.mxu0 0.0
    %1073 = vmatprep.subr.mxu0 0.0
    %1074 = vmatpush2.msra.mxu0 0.0
    %1075 = vmatprep.subr.mxu0 0.0
    %1076 = vmatpush2.msra.mxu0 0.0
    %1077 = vmatprep.subr.mxu0 0.0
    %1078 = vmatpush2.msra.mxu0 0.0
    %1079 = vmatprep.subr.mxu0 0.0
    %1080 = vmatpush2.msra.mxu0 0.0
    %1081 = vmatprep.subr.mxu0 0.0
    %1082 = vmatpush2.msra.mxu0 0.0
    %1083 = vmatprep.subr.mxu0 0.0
    %1084 = vmatpush2.msra.mxu0 0.0
    %1085 = vmatprep.mubr.f32.mxu0 0.0
    %1086 = vmatmul.mubr.f32.gmra.mxu0 %v844
    %v1087 = vpop.f32.mrf.mxu0
    %v1088 = vadd.f32 %v1019, %v1087
    %v1089 = vpop.f32.mrf.mxu0
    %1090 = vmatprep.mubr.f32.mxu0 0.0
    %1091 = vmatmul.mubr.f32.gmra.mxu0 %v845
    %v1092 = vpop.f32.mrf.mxu0
    %v1093 = vadd.f32 %v1019, %v1092
    %v1094 = vpop.f32.mrf.mxu0
    %1095 = vmatprep.mubr.f32.mxu0 0.0
    %1096 = vmatmul.mubr.f32.gmra.mxu0 %v846
    %v1097 = vpop.f32.mrf.mxu0
    %v1098 = vadd.f32 %v1019, %v1097
    %v1099 = vpop.f32.mrf.mxu0
    %1100 = vmatprep.mubr.f32.mxu0 0.0
    %1101 = vmatmul.mubr.f32.gmra.mxu0 %v847
    %v1102 = vpop.f32.mrf.mxu0
    %v1103 = vadd.f32 %v1019, %v1102
    %v1104 = vpop.f32.mrf.mxu0
    %1105 = vmatprep.mubr.f32.mxu0 0.0
    %1106 = vmatmul.mubr.f32.gmra.mxu0 %v848
    %v1107 = vpop.f32.mrf.mxu0
    %v1108 = vadd.f32 %v1019, %v1107
    %v1109 = vpop.f32.mrf.mxu0
    %1110 = vmatprep.mubr.f32.mxu0 0.0
    %1111 = vmatmul.mubr.f32.gmra.mxu0 %v849
    %v1112 = vpop.f32.mrf.mxu0
    %v1113 = vadd.f32 %v1019, %v1112
    %v1114 = vpop.f32.mrf.mxu0
    %1115 = vmatprep.mubr.f32.mxu0 0.0
    %1116 = vmatmul.mubr.f32.gmra.mxu0 %v850
    %v1117 = vpop.f32.mrf.mxu0
    %v1118 = vadd.f32 %v1019, %v1117
    %v1119 = vpop.f32.mrf.mxu0
    %1120 = vmatprep.mubr.f32.mxu0 0.0
    %1121 = vmatmul.mubr.f32.gmra.mxu0 %v851
    %v1122 = vpop.f32.mrf.mxu0
    %v1123 = vadd.f32 %v1019, %v1122
    %v1124 = vpop.f32.mrf.mxu0
    %1125 = vmatprep.mubr.f32.mxu0 0.0
    %1126 = vmatmul.mubr.f32.gmra.mxu0 %v852
    %v1127 = vpop.f32.mrf.mxu0
    %v1128 = vadd.f32 %v1019, %v1127
    %v1129 = vpop.f32.mrf.mxu0
    %1130 = vmatprep.mubr.f32.mxu0 0.0
    %1131 = vmatmul.mubr.f32.gmra.mxu0 %v853
    %v1132 = vpop.f32.mrf.mxu0
    %v1133 = vadd.f32 %v1019, %v1132
    %v1134 = vpop.f32.mrf.mxu0
    %1135 = vmatprep.mubr.f32.mxu0 0.0
    %1136 = vmatmul.mubr.f32.gmra.mxu0 %v854
    %v1137 = vpop.f32.mrf.mxu0
    %v1138 = vadd.f32 %v1019, %v1137
    %v1139 = vpop.f32.mrf.mxu0
    %1140 = vmatprep.mubr.f32.mxu0 0.0
    %1141 = vmatmul.mubr.f32.gmra.mxu0 %v855
    %v1142 = vpop.f32.mrf.mxu0
    %v1143 = vadd.f32 %v1019, %v1142
    %v1144 = vpop.f32.mrf.mxu0
    %1145 = vmatprep.mubr.f32.mxu0 0.0
    %1146 = vmatmul.mubr.f32.gmra.mxu0 %v856
    %v1147 = vpop.f32.mrf.mxu0
    %v1148 = vadd.f32 %v1019, %v1147
    %v1149 = vpop.f32.mrf.mxu0
    %1150 = vmatprep.mubr.f32.mxu0 0.0
    %1151 = vmatmul.mubr.f32.gmra.mxu0 %v857
    %v1152 = vpop.f32.mrf.mxu0
    %v1153 = vadd.f32 %v1019, %v1152
    %v1154 = vpop.f32.mrf.mxu0
    %1155 = vmatprep.mubr.f32.mxu0 0.0
    %1156 = vmatmul.mubr.f32.gmra.mxu0 %v858
    %v1157 = vpop.f32.mrf.mxu0
    %v1158 = vadd.f32 %v1019, %v1157
    %v1159 = vpop.f32.mrf.mxu0
    %1160 = vmatprep.mubr.f32.mxu0 0.0
    %1161 = vmatmul.mubr.f32.gmra.mxu0 %v859
    %v1162 = vpop.f32.mrf.mxu0
    %v1163 = vadd.f32 %v1019, %v1162
    %v1164 = vpop.f32.mrf.mxu0
    %1165 = vdwg.mxu0
    %v1166 = vmax.f32 %v1088, 0.0
    %v1167 = vmax.f32 %v1093, 0.0
    %v1168 = vmax.f32 %v1098, 0.0
    %v1169 = vmax.f32 %v1103, 0.0
    %v1170 = vmax.f32 %v1108, 0.0
    %v1171 = vmax.f32 %v1113, 0.0
    %v1172 = vmax.f32 %v1118, 0.0
    %v1173 = vmax.f32 %v1123, 0.0
    %v1174 = vmax.f32 %v1128, 0.0
    %v1175 = vmax.f32 %v1133, 0.0
    %v1176 = vmax.f32 %v1138, 0.0
    %v1177 = vmax.f32 %v1143, 0.0
    %v1178 = vmax.f32 %v1148, 0.0
    %v1179 = vmax.f32 %v1153, 0.0
    %v1180 = vmax.f32 %v1158, 0.0
    %v1181 = vmax.f32 %v1163, 0.0
    %v1183 = vsel %vm139, %v1166, 0
    %v1186 = vsel %vm139, %v1167, 0
    %v1189 = vsel %vm139, %v1168, 0
    %v1192 = vsel %vm139, %v1169, 0
    %v1195 = vsel %vm139, %v1170, 0
    %v1198 = vsel %vm139, %v1171, 0
    %v1201 = vsel %vm139, %v1172, 0
    %v1204 = vsel %vm139, %v1173, 0
    %v1207 = vsel %vm139, %v1174, 0
    %v1210 = vsel %vm139, %v1175, 0
    %v1213 = vsel %vm139, %v1176, 0
    %v1216 = vsel %vm139, %v1177, 0
    %v1219 = vsel %vm139, %v1178, 0
    %v1222 = vsel %vm139, %v1179, 0
    %v1225 = vsel %vm139, %v1180, 0
    %v1228 = vsel %vm139, %v1181, 0
    %1230 = vmatprep.subr.mxu0 0.0
    %1231 = vmatpush1.msra.mxu0 0.0
    %1232 = vmatprep.subr.mxu0 0.0
    %1233 = vmatpush1.msra.mxu0 0.0
    %1234 = vmatprep.subr.mxu0 0.0
    %1235 = vmatpush1.msra.mxu0 0.0
    %1236 = vmatprep.subr.mxu0 0.0
    %1237 = vmatpush1.msra.mxu0 0.0
    %1238 = vmatprep.subr.mxu0 0.0
    %1239 = vmatpush1.msra.mxu0 0.0
    %1240 = vmatprep.subr.mxu0 0.0
    %1241 = vmatpush1.msra.mxu0 0.0
    %1242 = vmatprep.subr.mxu0 0.0
    %1243 = vmatpush1.msra.mxu0 0.0
    %1244 = vmatprep.subr.mxu0 0.0
    %1245 = vmatpush1.msra.mxu0 0.0
    %1246 = vmatprep.subr.mxu0 0.0
    %1247 = vmatpush1.msra.mxu0 0.0
    %1248 = vmatprep.subr.mxu0 0.0
    %1249 = vmatpush1.msra.mxu0 0.0
    %1250 = vmatprep.subr.mxu0 0.0
    %1251 = vmatpush1.msra.mxu0 0.0
    %1252 = vmatprep.subr.mxu0 0.0
    %1253 = vmatpush1.msra.mxu0 0.0
    %1254 = vmatprep.subr.mxu0 0.0
    %1255 = vmatpush1.msra.mxu0 %v868
    %1256 = vmatprep.subr.mxu0 0.0
    %1257 = vmatpush1.msra.mxu0 %v867
    %1258 = vmatprep.subr.mxu0 0.0
    %1259 = vmatpush1.msra.mxu0 %v866
    %1260 = vmatprep.subr.mxu0 0.0
    %1261 = vmatpush1.msra.mxu0 %v865
    %1262 = vmatprep.subr.mxu0 0.0
    %1263 = vmatpush2.msra.mxu0 0.0
    %1264 = vmatprep.subr.mxu0 0.0
    %1265 = vmatpush2.msra.mxu0 0.0
    %1266 = vmatprep.subr.mxu0 0.0
    %1267 = vmatpush2.msra.mxu0 0.0
    %1268 = vmatprep.subr.mxu0 0.0
    %1269 = vmatpush2.msra.mxu0 0.0
    %1270 = vmatprep.subr.mxu0 0.0
    %1271 = vmatpush2.msra.mxu0 0.0
    %1272 = vmatprep.subr.mxu0 0.0
    %1273 = vmatpush2.msra.mxu0 0.0
    %1274 = vmatprep.subr.mxu0 0.0
    %1275 = vmatpush2.msra.mxu0 0.0
    %1276 = vmatprep.subr.mxu0 0.0
    %1277 = vmatpush2.msra.mxu0 0.0
    %1278 = vmatprep.subr.mxu0 0.0
    %1279 = vmatpush2.msra.mxu0 0.0
    %1280 = vmatprep.subr.mxu0 0.0
    %1281 = vmatpush2.msra.mxu0 0.0
    %1282 = vmatprep.subr.mxu0 0.0
    %1283 = vmatpush2.msra.mxu0 0.0
    %1284 = vmatprep.subr.mxu0 0.0
    %1285 = vmatpush2.msra.mxu0 0.0
    %1286 = vmatprep.subr.mxu0 0.0
    %1287 = vmatpush2.msra.mxu0 0.0
    %1288 = vmatprep.subr.mxu0 0.0
    %1289 = vmatpush2.msra.mxu0 0.0
    %1290 = vmatprep.subr.mxu0 0.0
    %1291 = vmatpush2.msra.mxu0 0.0
    %1292 = vmatprep.subr.mxu0 0.0
    %1293 = vmatpush2.msra.mxu0 0.0
    %1294 = vmatprep.mubr.f32.mxu0 0.0
    %1295 = vmatmul.mubr.f32.gmra.mxu0 %v1183
    %v1296 = vpop.f32.mrf.mxu0
    %v1297 = vadd.f32 0.0, %v1296
    %v1298 = vpop.f32.mrf.mxu0
    %1299 = vmatprep.mubr.f32.mxu0 0.0
    %1300 = vmatmul.mubr.f32.gmra.mxu0 %v1186
    %v1301 = vpop.f32.mrf.mxu0
    %v1302 = vadd.f32 0.0, %v1301
    %v1303 = vpop.f32.mrf.mxu0
    %1304 = vmatprep.mubr.f32.mxu0 0.0
    %1305 = vmatmul.mubr.f32.gmra.mxu0 %v1189
    %v1306 = vpop.f32.mrf.mxu0
    %v1307 = vadd.f32 0.0, %v1306
    %v1308 = vpop.f32.mrf.mxu0
    %1309 = vmatprep.mubr.f32.mxu0 0.0
    %1310 = vmatmul.mubr.f32.gmra.mxu0 %v1192
    %v1311 = vpop.f32.mrf.mxu0
    %v1312 = vadd.f32 0.0, %v1311
    %v1313 = vpop.f32.mrf.mxu0
    %1314 = vmatprep.mubr.f32.mxu0 0.0
    %1315 = vmatmul.mubr.f32.gmra.mxu0 %v1195
    %v1316 = vpop.f32.mrf.mxu0
    %v1317 = vadd.f32 0.0, %v1316
    %v1318 = vpop.f32.mrf.mxu0
    %1319 = vmatprep.mubr.f32.mxu0 0.0
    %1320 = vmatmul.mubr.f32.gmra.mxu0 %v1198
    %v1321 = vpop.f32.mrf.mxu0
    %v1322 = vadd.f32 0.0, %v1321
    %v1323 = vpop.f32.mrf.mxu0
    %1324 = vmatprep.mubr.f32.mxu0 0.0
    %1325 = vmatmul.mubr.f32.gmra.mxu0 %v1201
    %v1326 = vpop.f32.mrf.mxu0
    %v1327 = vadd.f32 0.0, %v1326
    %v1328 = vpop.f32.mrf.mxu0
    %1329 = vmatprep.mubr.f32.mxu0 0.0
    %1330 = vmatmul.mubr.f32.gmra.mxu0 %v1204
    %v1331 = vpop.f32.mrf.mxu0
    %v1332 = vadd.f32 0.0, %v1331
    %v1333 = vpop.f32.mrf.mxu0
    %1334 = vmatprep.mubr.f32.mxu0 0.0
    %1335 = vmatmul.mubr.f32.gmra.mxu0 %v1207
    %v1336 = vpop.f32.mrf.mxu0
    %v1337 = vadd.f32 0.0, %v1336
    %v1338 = vpop.f32.mrf.mxu0
    %1339 = vmatprep.mubr.f32.mxu0 0.0
    %1340 = vmatmul.mubr.f32.gmra.mxu0 %v1210
    %v1341 = vpop.f32.mrf.mxu0
    %v1342 = vadd.f32 0.0, %v1341
    %v1343 = vpop.f32.mrf.mxu0
    %1344 = vmatprep.mubr.f32.mxu0 0.0
    %1345 = vmatmul.mubr.f32.gmra.mxu0 %v1213
    %v1346 = vpop.f32.mrf.mxu0
    %v1347 = vadd.f32 0.0, %v1346
    %v1348 = vpop.f32.mrf.mxu0
    %1349 = vmatprep.mubr.f32.mxu0 0.0
    %1350 = vmatmul.mubr.f32.gmra.mxu0 %v1216
    %v1351 = vpop.f32.mrf.mxu0
    %v1352 = vadd.f32 0.0, %v1351
    %v1353 = vpop.f32.mrf.mxu0
    %1354 = vmatprep.mubr.f32.mxu0 0.0
    %1355 = vmatmul.mubr.f32.gmra.mxu0 %v1219
    %v1356 = vpop.f32.mrf.mxu0
    %v1357 = vadd.f32 0.0, %v1356
    %v1358 = vpop.f32.mrf.mxu0
    %1359 = vmatprep.mubr.f32.mxu0 0.0
    %1360 = vmatmul.mubr.f32.gmra.mxu0 %v1222
    %v1361 = vpop.f32.mrf.mxu0
    %v1362 = vadd.f32 0.0, %v1361
    %v1363 = vpop.f32.mrf.mxu0
    %1364 = vmatprep.mubr.f32.mxu0 0.0
    %1365 = vmatmul.mubr.f32.gmra.mxu0 %v1225
    %v1366 = vpop.f32.mrf.mxu0
    %v1367 = vadd.f32 0.0, %v1366
    %v1368 = vpop.f32.mrf.mxu0
    %1369 = vmatprep.mubr.f32.mxu0 0.0
    %1370 = vmatmul.mubr.f32.gmra.mxu0 %v1228
    %v1371 = vpop.f32.mrf.mxu0
    %v1372 = vadd.f32 0.0, %v1371
    %v1373 = vpop.f32.mrf.mxu0
    %1374 = vdwg.mxu0
    %v1376 = vlaneseq
    %v1377 = vshrl.u32 %v1376, 7
    %v1378 = vsub.s32 0, %v1377
    %v1379 = vrot.slane %v869, %v1378
    %1381 = vmatprep.subr.mxu0 0.0
    %1382 = vmatpush1.msra.mxu0 %v1372
    %1383 = vmatprep.subr.mxu0 0.0
    %1384 = vmatpush1.msra.mxu0 %v1367
    %1385 = vmatprep.subr.mxu0 0.0
    %1386 = vmatpush1.msra.mxu0 %v1362
    %1387 = vmatprep.subr.mxu0 0.0
    %1388 = vmatpush1.msra.mxu0 %v1357
    %1389 = vmatprep.subr.mxu0 0.0
    %1390 = vmatpush1.msra.mxu0 %v1352
    %1391 = vmatprep.subr.mxu0 0.0
    %1392 = vmatpush1.msra.mxu0 %v1347
    %1393 = vmatprep.subr.mxu0 0.0
    %1394 = vmatpush1.msra.mxu0 %v1342
    %1395 = vmatprep.subr.mxu0 0.0
    %1396 = vmatpush1.msra.mxu0 %v1337
    %1397 = vmatprep.subr.mxu0 0.0
    %1398 = vmatpush1.msra.mxu0 %v1332
    %1399 = vmatprep.subr.mxu0 0.0
    %1400 = vmatpush1.msra.mxu0 %v1327
    %1401 = vmatprep.subr.mxu0 0.0
    %1402 = vmatpush1.msra.mxu0 %v1322
    %1403 = vmatprep.subr.mxu0 0.0
    %1404 = vmatpush1.msra.mxu0 %v1317
    %1405 = vmatprep.subr.mxu0 0.0
    %1406 = vmatpush1.msra.mxu0 %v1312
    %1407 = vmatprep.subr.mxu0 0.0
    %1408 = vmatpush1.msra.mxu0 %v1307
    %1409 = vmatprep.subr.mxu0 0.0
    %1410 = vmatpush1.msra.mxu0 %v1302
    %1411 = vmatprep.subr.mxu0 0.0
    %1412 = vmatpush1.msra.mxu0 %v1297
    %1413 = vmatprep.subr.mxu0 0.0
    %1414 = vmatpush2.msra.mxu0 0.0
    %1415 = vmatprep.subr.mxu0 0.0
    %1416 = vmatpush2.msra.mxu0 0.0
    %1417 = vmatprep.subr.mxu0 0.0
    %1418 = vmatpush2.msra.mxu0 0.0
    %1419 = vmatprep.subr.mxu0 0.0
    %1420 = vmatpush2.msra.mxu0 0.0
    %1421 = vmatprep.subr.mxu0 0.0
    %1422 = vmatpush2.msra.mxu0 0.0
    %1423 = vmatprep.subr.mxu0 0.0
    %1424 = vmatpush2.msra.mxu0 0.0
    %1425 = vmatprep.subr.mxu0 0.0
    %1426 = vmatpush2.msra.mxu0 0.0
    %1427 = vmatprep.subr.mxu0 0.0
    %1428 = vmatpush2.msra.mxu0 0.0
    %1429 = vmatprep.subr.mxu0 0.0
    %1430 = vmatpush2.msra.mxu0 0.0
    %1431 = vmatprep.subr.mxu0 0.0
    %1432 = vmatpush2.msra.mxu0 0.0
    %1433 = vmatprep.subr.mxu0 0.0
    %1434 = vmatpush2.msra.mxu0 0.0
    %1435 = vmatprep.subr.mxu0 0.0
    %1436 = vmatpush2.msra.mxu0 0.0
    %1437 = vmatprep.subr.mxu0 0.0
    %1438 = vmatpush2.msra.mxu0 0.0
    %1439 = vmatprep.subr.mxu0 0.0
    %1440 = vmatpush2.msra.mxu0 0.0
    %1441 = vmatprep.subr.mxu0 0.0
    %1442 = vmatpush2.msra.mxu0 0.0
    %1443 = vmatprep.subr.mxu0 0.0
    %1444 = vmatpush2.msra.mxu0 0.0
    %1445 = vmatprep.mubr.f32.mxu0 0.0
    %1446 = vmatmul.mubr.f32.gmra.mxu0 %v844
    %v1447 = vpop.f32.mrf.mxu0
    %v1448 = vadd.f32 %v1379, %v1447
    %v1449 = vpop.f32.mrf.mxu0
    %1450 = vmatprep.mubr.f32.mxu0 0.0
    %1451 = vmatmul.mubr.f32.gmra.mxu0 %v845
    %v1452 = vpop.f32.mrf.mxu0
    %v1453 = vadd.f32 %v1379, %v1452
    %v1454 = vpop.f32.mrf.mxu0
    %1455 = vmatprep.mubr.f32.mxu0 0.0
    %1456 = vmatmul.mubr.f32.gmra.mxu0 %v846
    %v1457 = vpop.f32.mrf.mxu0
    %v1458 = vadd.f32 %v1379, %v1457
    %v1459 = vpop.f32.mrf.mxu0
    %1460 = vmatprep.mubr.f32.mxu0 0.0
    %1461 = vmatmul.mubr.f32.gmra.mxu0 %v847
    %v1462 = vpop.f32.mrf.mxu0
    %v1463 = vadd.f32 %v1379, %v1462
    %v1464 = vpop.f32.mrf.mxu0
    %1465 = vmatprep.mubr.f32.mxu0 0.0
    %1466 = vmatmul.mubr.f32.gmra.mxu0 %v848
    %v1467 = vpop.f32.mrf.mxu0
    %v1468 = vadd.f32 %v1379, %v1467
    %v1469 = vpop.f32.mrf.mxu0
    %1470 = vmatprep.mubr.f32.mxu0 0.0
    %1471 = vmatmul.mubr.f32.gmra.mxu0 %v849
    %v1472 = vpop.f32.mrf.mxu0
    %v1473 = vadd.f32 %v1379, %v1472
    %v1474 = vpop.f32.mrf.mxu0
    %1475 = vmatprep.mubr.f32.mxu0 0.0
    %1476 = vmatmul.mubr.f32.gmra.mxu0 %v850
    %v1477 = vpop.f32.mrf.mxu0
    %v1478 = vadd.f32 %v1379, %v1477
    %v1479 = vpop.f32.mrf.mxu0
    %1480 = vmatprep.mubr.f32.mxu0 0.0
    %1481 = vmatmul.mubr.f32.gmra.mxu0 %v851
    %v1482 = vpop.f32.mrf.mxu0
    %v1483 = vadd.f32 %v1379, %v1482
    %v1484 = vpop.f32.mrf.mxu0
    %1485 = vmatprep.mubr.f32.mxu0 0.0
    %1486 = vmatmul.mubr.f32.gmra.mxu0 %v852
    %v1487 = vpop.f32.mrf.mxu0
    %v1488 = vadd.f32 %v1379, %v1487
    %v1489 = vpop.f32.mrf.mxu0
    %1490 = vmatprep.mubr.f32.mxu0 0.0
    %1491 = vmatmul.mubr.f32.gmra.mxu0 %v853
    %v1492 = vpop.f32.mrf.mxu0
    %v1493 = vadd.f32 %v1379, %v1492
    %v1494 = vpop.f32.mrf.mxu0
    %1495 = vmatprep.mubr.f32.mxu0 0.0
    %1496 = vmatmul.mubr.f32.gmra.mxu0 %v854
    %v1497 = vpop.f32.mrf.mxu0
    %v1498 = vadd.f32 %v1379, %v1497
    %v1499 = vpop.f32.mrf.mxu0
    %1500 = vmatprep.mubr.f32.mxu0 0.0
    %1501 = vmatmul.mubr.f32.gmra.mxu0 %v855
    %v1502 = vpop.f32.mrf.mxu0
    %v1503 = vadd.f32 %v1379, %v1502
    %v1504 = vpop.f32.mrf.mxu0
    %1505 = vmatprep.mubr.f32.mxu0 0.0
    %1506 = vmatmul.mubr.f32.gmra.mxu0 %v856
    %v1507 = vpop.f32.mrf.mxu0
    %v1508 = vadd.f32 %v1379, %v1507
    %v1509 = vpop.f32.mrf.mxu0
    %1510 = vmatprep.mubr.f32.mxu0 0.0
    %1511 = vmatmul.mubr.f32.gmra.mxu0 %v857
    %v1512 = vpop.f32.mrf.mxu0
    %v1513 = vadd.f32 %v1379, %v1512
    %v1514 = vpop.f32.mrf.mxu0
    %1515 = vmatprep.mubr.f32.mxu0 0.0
    %1516 = vmatmul.mubr.f32.gmra.mxu0 %v858
    %v1517 = vpop.f32.mrf.mxu0
    %v1518 = vadd.f32 %v1379, %v1517
    %v1519 = vpop.f32.mrf.mxu0
    %1520 = vmatprep.mubr.f32.mxu0 0.0
    %1521 = vmatmul.mubr.f32.gmra.mxu0 %v859
    %v1522 = vpop.f32.mrf.mxu0
    %v1523 = vadd.f32 %v1379, %v1522
    %v1524 = vpop.f32.mrf.mxu0
    %1525 = vdwg.mxu0
    %s1526 = sld [smem:[#allocation2]]
    %v1527 = vstv %s1526
    %v1528 = vmul.f32 %v1527, %v1448
    %v1529 = vmul.f32 %v1527, %v1453
    %v1530 = vmul.f32 %v1527, %v1458
    %v1531 = vmul.f32 %v1527, %v1463
    %v1532 = vmul.f32 %v1527, %v1468
    %v1533 = vmul.f32 %v1527, %v1473
    %v1534 = vmul.f32 %v1527, %v1478
    %v1535 = vmul.f32 %v1527, %v1483
    %v1536 = vmul.f32 %v1527, %v1488
    %v1537 = vmul.f32 %v1527, %v1493
    %v1538 = vmul.f32 %v1527, %v1498
    %v1539 = vmul.f32 %v1527, %v1503
    %v1540 = vmul.f32 %v1527, %v1508
    %v1541 = vmul.f32 %v1527, %v1513
    %v1542 = vmul.f32 %v1527, %v1518
    %v1543 = vmul.f32 %v1527, %v1523
    %v1544 = vsub.f32 %v766, %v1528
    %v1545 = vsub.f32 %v771, %v1529
    %v1546 = vsub.f32 %v776, %v1530
    %v1547 = vsub.f32 %v781, %v1531
    %v1548 = vsub.f32 %v786, %v1532
    %v1549 = vsub.f32 %v791, %v1533
    %v1550 = vsub.f32 %v796, %v1534
    %v1551 = vsub.f32 %v801, %v1535
    %v1552 = vsub.f32 %v806, %v1536
    %v1553 = vsub.f32 %v811, %v1537
    %v1554 = vsub.f32 %v816, %v1538
    %v1555 = vsub.f32 %v821, %v1539
    %v1556 = vsub.f32 %v826, %v1540
    %v1557 = vsub.f32 %v831, %v1541
    %v1558 = vsub.f32 %v836, %v1542
    %v1559 = vsub.f32 %v841, %v1543
    %1560 = vst.msk [vmem:[%s12] sm:$0xff] %vm139, %v1544
    %1561 = vst.msk [vmem:[%s12 + $0x8] sm:$0xff] %vm139, %v1545
    %1562 = vst.msk [vmem:[%s12 + $0x10] sm:$0xff] %vm139, %v1546
    %1563 = vst.msk [vmem:[%s12 + $0x18] sm:$0xff] %vm139, %v1547
    %1564 = vst.msk [vmem:[%s12 + $0x20] sm:$0xff] %vm139, %v1548
    %1565 = vst.msk [vmem:[%s12 + $0x28] sm:$0xff] %vm139, %v1549
    %1566 = vst.msk [vmem:[%s12 + $0x30] sm:$0xff] %vm139, %v1550
    %1567 = vst.msk [vmem:[%s12 + $0x38] sm:$0xff] %vm139, %v1551
    %1568 = vst.msk [vmem:[%s12 + $0x40] sm:$0xff] %vm139, %v1552
    %1569 = vst.msk [vmem:[%s12 + $0x48] sm:$0xff] %vm139, %v1553
    %1570 = vst.msk [vmem:[%s12 + $0x50] sm:$0xff] %vm139, %v1554
    %1571 = vst.msk [vmem:[%s12 + $0x58] sm:$0xff] %vm139, %v1555
    %1572 = vst.msk [vmem:[%s12 + $0x60] sm:$0xff] %vm139, %v1556
    %1573 = vst.msk [vmem:[%s12 + $0x68] sm:$0xff] %vm139, %v1557
    %1574 = vst.msk [vmem:[%s12 + $0x70] sm:$0xff] %vm139, %v1558
    %1575 = vst.msk [vmem:[%s12 + $0x78] sm:$0xff] %vm139, %v1559
    // Predicated region
    $region66: #{tpu_custom_call.1} parent=1 // pred_check
      _
    $region67: #{tpu_custom_call.1} parent=1 // pred_check_branch
      %1577 = sbr.rel (0) target = $region69
    $region68: #{tpu_custom_call.1} parent=1 // pred_region
      _
    $region69: #{tpu_custom_call.1} parent=1 // pred_fallthru
      _
    // Predicated region
    $region70: #{tpu_custom_call.1} parent=1 // pred_check
      _
    $region71: #{tpu_custom_call.1} parent=1 // pred_check_branch
      %1579 = sbr.rel (0) target = $region73
    $region72: #{tpu_custom_call.1} parent=1 // pred_region
      _
    $region73: #{tpu_custom_call.1} parent=1 // pred_fallthru
      _
    %1580 = vsyncpa [#allocation4], 1
    %1581 = vsyncpa [#allocation6], 1
    %1582 = vsyncpa [#allocation9], 1

</llo_original>
